<compile_context>
chip_gen: v6e
topology: v6e:2x2x1
jax: 0.10.0
libtpu: 0.0.40
codegen_flags: <defaults>
</compile_context>

<pallas_src>
import functools
import math

import jax
import jax.numpy as jnp
from jax.experimental import pallas as pl
from jax.experimental.pallas import tpu as pltpu

EPS = 1e-8


def _conv2dmod_kernel(x_ref, ysty_ref, w_ref, scale_ref, o_ref,
                      xmod_ref, work_ref, *, H, W, K, Cin, pad, demod,
                      use_im2col):
    # x_ref:     (1, H, W, Cin)    unpadded NHWC input (mod dtype), one batch elem
    # ysty_ref:  (1, 1, Cin)       (y + 1), float32
    # w_ref:     (K*K*Cin, TCout)  base weight, pre-transposed, rows = (kh,kw,cin)
    # scale_ref: (1, 1, TCout)     per-(batch, cout) demod scale, float32
    # o_ref:     (1, H*W, TCout)   lane-dense output block
    # xmod_ref:  (Hp, Wp, Cin)     VMEM scratch: zero-padded, modulated input
    # work_ref:  im2col slab (H*W, K*K*Cin) [use_im2col] OR f32 acc (H*W, TCout)

    # (1)+(2) Build the modulated + zero-padded input (and the fused im2col
    # slab on the small-Cin path) ONCE per batch element.  The Cout-tile axis
    # (program_id(1)) is "arbitrary" (sequential per core), so scratch written
    # at j == 0 is valid for every subsequent j of the same batch element.
    @pl.when(pl.program_id(1) == 0)
    def _build():
        ysty = ysty_ref[0]                                   # (1, Cin) f32
        if pad > 0:
            xmod_ref[...] = jnp.zeros_like(xmod_ref)         # halo zero-fill
        xmod = x_ref[0] * ysty.astype(x_ref.dtype)           # x * (y + 1)
        xmod_ref[pad:pad + H, pad:pad + W, :] = xmod.astype(xmod_ref.dtype)
        if use_im2col:
            for kh in range(K):
                for kw in range(K):
                    col = (kh * K + kw) * Cin
                    work_ref[:, col:col + Cin] = (
                        xmod_ref[kh:kh + H, kw:kw + W, :]
                        .reshape(H * W, Cin).astype(work_ref.dtype))

    # (3) Contraction on the MXU (f32 accumulation).
    if use_im2col:
        # One big matmul against the pre-transposed weight tile (no .T).
        acc = jnp.dot(work_ref[...], w_ref[...],
                      preferred_element_type=jnp.float32)    # (H*W, TCout)
    else:
        # Per-tap accumulating matmuls into the f32 VMEM acc scratch; the
        # weight rows for tap (kh,kw) are already contiguous (no transpose).
        for kh in range(K):
            for kw in range(K):
                tap = kh * K + kw
                lhs = (xmod_ref[kh:kh + H, kw:kw + W, :]
                       .reshape(H * W, Cin).astype(w_ref.dtype))
                contrib = jnp.dot(lhs, w_ref[tap * Cin:(tap + 1) * Cin, :],
                                  preferred_element_type=jnp.float32)
                if tap == 0:
                    work_ref[...] = contrib
                else:
                    work_ref[...] += contrib
        acc = work_ref[...]

    # (4) Demod scale + dtype cast fused into the final lane-dense store.
    if demod:
        acc = acc * scale_ref[0]                             # (1,TCout) bcast
    o_ref[0] = acc.astype(o_ref.dtype)


def _padded_vmem_bytes(shape, dtype):
    """Approximate VMEM bytes of a buffer after (sublane, lane) tile padding."""
    isz = jnp.dtype(dtype).itemsize
    sublane = 8 * max(1, 4 // isz)            # packed dtypes use taller sublane tiles
    dims = list(shape)
    dims[-1] = pl.cdiv(dims[-1], 128) * 128
    if len(dims) >= 2:
        dims[-2] = pl.cdiv(dims[-2], sublane) * sublane
    return math.prod(dims) * isz


@functools.lru_cache(maxsize=None)
def _tpu_defaults():
    """(device_kind, physical VMEM bytes, is_v5) — generation-aware defaults."""
    kind = ""
    try:
        kind = jax.devices()[0].device_kind.lower()
    except Exception:
        pass
    vmem_phys = None
    try:
        vmem_phys = int(pltpu.get_tpu_info().vmem_capacity_bytes)
    except Exception:
        vmem_phys = None
    if not vmem_phys or vmem_phys <= 0:
        vmem_phys = (64 << 20) if "v7" in kind else (128 << 20)
    return kind, vmem_phys, ("v5" in kind)


def conv2d_mod(x, y, weight, *, demod=True, stride=1, dilation=1,
               compute_dtype=jnp.bfloat16, tcout=None, use_im2col=None,
               mod_dtype=None):
    """Forward pass of Conv2DMod.

    x:      (B, Cin, H, W)  NCHW, like PyTorch
    y:      (B, Cin)        per-sample modulation
    weight: (Cout, Cin, K, K)
    returns (B, Cout, H, W)

    tcout:       output-channel tile width (default: 128 on v5e, 256 otherwise).
    use_im2col:  fuse the K*K taps into one matmul via an in-VMEM im2col slab
                 (default: only when Cin < 256 and the slab is small).
    compute_dtype: MXU operand dtype (bf16 default; accumulation is f32).
    """
    assert stride == 1 and dilation == 1     # module defaults / "same" output
    B, Cin, H, W = x.shape
    Cout, Cin_w, K, K2 = weight.shape
    assert Cin_w == Cin and K == K2
    assert K % 2 == 1, "'same' padding formula assumes odd kernel size"
    pad = ((H - 1) * (stride - 1) + dilation * (K - 1)) // 2
    Hp, Wp = H + 2 * pad, W + 2 * pad
    kkc = K * K * Cin
    out_dtype = x.dtype

    _, vmem_phys, is_v5 = _tpu_defaults()
    # Generation-aware VMEM cap: leave headroom on 64 MiB (v7x) parts, allow
    # ~100 MiB on 128 MiB (v5e/v6e) parts before shrinking tiles.
    vmem_budget = max(min(100 << 20, vmem_phys - (8 << 20)), 32 << 20)
    if tcout is None:
        tcout = 128 if is_v5 else 256        # match MXU width (v5e: 4x128^2)
    if mod_dtype is None:
        # v5e VPU has no native bf16: keep the x*(y+1) modulation in f32 there
        # and cast to the MXU operand dtype only when forming the matmul LHS.
        mod_dtype = (jnp.float32 if (is_v5 and compute_dtype != jnp.float32)
                     else compute_dtype)

    # Lane-dense output channels: pad Cout up to a multiple of 128, tile by tc.
    LANE = 128
    Cout_p = pl.cdiv(max(Cout, LANE), LANE) * LANE
    tc = min(tcout, Cout_p)
    Cout_p = pl.cdiv(Cout_p, tc) * tc
    n_ct = Cout_p // tc

    if use_im2col is None:
        # Fuse the K*K taps only when the contraction (Cin) would otherwise be
        # thin; at Cin >= 256 the MXU is already saturated and the K^2
        # duplicated slab is pure vst/VMEM waste.
        slab = _padded_vmem_bytes((H * W, kkc), compute_dtype)
        use_im2col = (K > 1) and (Cin < 256) and (slab * 3 <= vmem_budget)

    # ---- layout plumbing (wrapper): NHWC transpose + weight/scale prep ----
    x_in = jnp.transpose(x, (0, 2, 3, 1)).astype(mod_dtype)   # unpadded NHWC
    # weight pre-transposed to (K*K*Cin, Cout): row order (kh, kw, cin), cin fastest
    w_t = jnp.transpose(weight, (2, 3, 1, 0)).reshape(kkc, Cout)
    w_t = jnp.pad(w_t, ((0, 0), (0, Cout_p - Cout))).astype(compute_dtype)
    ysty = (y.astype(jnp.float32) + 1.0).reshape(B, 1, Cin)
    if demod:
        # rsqrt(sum_{cin,kh,kw} (w*(y+1))^2 + eps) = rsqrt((y+1)^2 @ sum_kk w^2 + eps)
        wsq = jnp.sum(weight.astype(jnp.float32) ** 2, axis=(2, 3))   # (Cout, Cin)
        denom = jnp.einsum('bc,oc->bo', jnp.square(ysty[:, 0]), wsq) + EPS
        scale = jax.lax.rsqrt(denom)                                  # (B, Cout)
        scale = jnp.pad(scale, ((0, 0), (0, Cout_p - Cout)))
    else:
        scale = jnp.ones((B, Cout_p), jnp.float32)
    scale = scale.reshape(B, 1, Cout_p)

    # Explicit, tile-sized VMEM budget (double-buffered blocks + scratch).
    work_shape = (H * W, kkc) if use_im2col else (H * W, tc)
    work_dtype = compute_dtype if use_im2col else jnp.float32
    est = (2 * _padded_vmem_bytes((1, H, W, Cin), mod_dtype)
           + 2 * _padded_vmem_bytes((1, 1, Cin), jnp.float32)
           + 2 * _padded_vmem_bytes((kkc, tc), compute_dtype)
           + 2 * _padded_vmem_bytes((1, 1, tc), jnp.float32)
           + 2 * _padded_vmem_bytes((1, H * W, tc), out_dtype)
           + _padded_vmem_bytes((Hp, Wp, Cin), mod_dtype)
           + _padded_vmem_bytes(work_shape, work_dtype))
    vmem_limit = int(min(max(est * 3 // 2, 16 << 20), vmem_budget))

    kernel = functools.partial(
        _conv2dmod_kernel, H=H, W=W, K=K, Cin=Cin, pad=pad, demod=demod,
        use_im2col=use_im2col)

    # TODO(synk): for very large spatial sizes at B=1 on v7x, add H row-strip
    # tiling with a (K-1) halo (manual make_async_copy double-buffer; halo
    # overlap is not expressible with a Blocked index_map) to shrink the
    # per-step input/xmod footprint further and expose a second parallel axis.
    out = pl.pallas_call(
        kernel,
        out_shape=jax.ShapeDtypeStruct((B, H * W, Cout_p), out_dtype),
        grid=(B, n_ct),
        in_specs=[
            pl.BlockSpec((1, H, W, Cin), lambda b, j: (b, 0, 0, 0)),
            pl.BlockSpec((1, 1, Cin), lambda b, j: (b, 0, 0)),
            pl.BlockSpec((kkc, tc), lambda b, j: (0, j)),
            pl.BlockSpec((1, 1, tc), lambda b, j: (b, 0, j)),
        ],
        out_specs=pl.BlockSpec((1, H * W, tc), lambda b, j: (b, 0, j)),
        scratch_shapes=[
            pltpu.VMEM((Hp, Wp, Cin), mod_dtype),   # zero-padded modulated input
            pltpu.VMEM(work_shape, work_dtype),     # im2col slab OR f32 acc
        ],
        compiler_params=pltpu.CompilerParams(
            # j (Cout tiles) MUST be sequential per core ("arbitrary"): scratch
            # built under the j==0 gate is reused for j > 0 of the same b.
            dimension_semantics=("parallel", "arbitrary"),
            vmem_limit_bytes=vmem_limit),
    )(x_in, ysty, w_t, scale)

    out = out[:, :, :Cout].reshape(B, H, W, Cout)
    return jnp.transpose(out, (0, 3, 1, 2))               # back to NCHW


def conv2d_mod_reference(x, y, weight, *, demod=True):
    """Pure-JAX reference mirroring the PyTorch forward (grouped conv)."""
    B, Cin, H, W = x.shape
    Cout, _, K, _ = weight.shape
    wmod = weight[None] * (y[:, None, :, None, None] + 1.0)       # (B,Cout,Cin,K,K)
    if demod:
        d = jax.lax.rsqrt(jnp.sum(wmod ** 2, axis=(2, 3, 4), keepdims=True) + EPS)
        wmod = wmod * d
    pad = (K - 1) // 2
    outs = []
    for i in range(B):
        o = jax.lax.conv_general_dilated(
            x[i:i + 1], wmod[i],
            window_strides=(1, 1),
            padding=[(pad, pad), (pad, pad)],
            dimension_numbers=("NCHW", "OIHW", "NCHW"),
        )
        outs.append(o)
    return jnp.concatenate(outs, axis=0)


if __name__ == "__main__":
    B, Cin, Cout, H, W, K = 2, 4, 8, 16, 16, 3

    key = jax.random.PRNGKey(0)
    kx, ky, kw = jax.random.split(key, 3)

    x = jax.random.normal(kx, (B, Cin, H, W), dtype=jnp.float32)
    y = jax.random.normal(ky, (B, Cin), dtype=jnp.float32)

    # kaiming_normal_(a=0, mode='fan_in', nonlinearity='leaky_relu'):
    # gain = sqrt(2), std = gain / sqrt(fan_in)
    fan_in = Cin * K * K
    std = (2.0 ** 0.5) / (fan_in ** 0.5)
    weight = std * jax.random.normal(kw, (Cout, Cin, K, K), dtype=jnp.float32)

    ref = conv2d_mod_reference(x, y, weight, demod=True)

    # f32 compute, fused-im2col path (auto-selected for small Cin).
    out_f32 = jax.block_until_ready(
        conv2d_mod(x, y, weight, demod=True, compute_dtype=jnp.float32))
    assert out_f32.shape == (B, Cout, H, W)
    assert jnp.allclose(out_f32, ref, atol=1e-4, rtol=1e-4), "f32 (im2col) mismatch"

    # f32 compute, per-tap accumulation path (the large-Cin code path).
    out_tap = jax.block_until_ready(
        conv2d_mod(x, y, weight, demod=True, compute_dtype=jnp.float32,
                   use_im2col=False))
    assert jnp.allclose(out_tap, ref, atol=1e-4, rtol=1e-4), "f32 (per-tap) mismatch"

    # demod=False branch.
    ref_nd = conv2d_mod_reference(x, y, weight, demod=False)
    out_nd = jax.block_until_ready(
        conv2d_mod(x, y, weight, demod=False, compute_dtype=jnp.float32))
    assert jnp.allclose(out_nd, ref_nd, atol=1e-4, rtol=1e-4), "demod=False mismatch"

    # Multi-Cout-tile case exercises the j==0 scratch gating (n_ct > 1).
    B2, Cout2, H2, W2 = 1, 320, 8, 8
    k2x, k2y, k2w = jax.random.split(jax.random.PRNGKey(1), 3)
    x2 = jax.random.normal(k2x, (B2, Cin, H2, W2), dtype=jnp.float32)
    y2 = jax.random.normal(k2y, (B2, Cin), dtype=jnp.float32)
    w2 = std * jax.random.normal(k2w, (Cout2, Cin, K, K), dtype=jnp.float32)
    ref2 = conv2d_mod_reference(x2, y2, w2, demod=True)
    out2 = jax.block_until_ready(
        conv2d_mod(x2, y2, w2, demod=True, compute_dtype=jnp.float32))
    assert out2.shape == (B2, Cout2, H2, W2)
    assert jnp.allclose(out2, ref2, atol=1e-4, rtol=1e-4), "multi-tile mismatch"

    # Default bf16 MXU operands + f32 accumulation (2x MXU throughput, half the
    # VMEM/HBM footprint).  Note: the input-side x*(y+1) is bf16 while the
    # demod denominator is exact f32 (slight numerator/denominator mismatch);
    # tolerance reflects bf16 operand rounding (~0.4% rel).
    out_bf16 = jax.block_until_ready(conv2d_mod(x, y, weight, demod=True))
    assert out_bf16.shape == (B, Cout, H, W)
    assert jnp.allclose(out_bf16, ref, atol=5e-2, rtol=5e-2), "bf16 mismatch vs reference"

    print("KERNEL_OK")
</pallas_src>

<mosaic_0001>
module attributes {stable_mosaic.version = 11 : i64} {
  func.func @_conv2dmod_kernel(%arg0: i32, %arg1: i32, %arg2: memref<1x16x16x4xf32, #tpu.memory_space<vmem>>, %arg3: memref<1x1x4xf32, #tpu.memory_space<vmem>>, %arg4: memref<36x128xf32, #tpu.memory_space<vmem>>, %arg5: memref<1x1x128xf32, #tpu.memory_space<vmem>>, %arg6: memref<1x256x128xf32, #tpu.memory_space<vmem>>, %arg7: memref<18x18x4xf32, #tpu.memory_space<vmem>>, %arg8: memref<256x36xf32, #tpu.memory_space<vmem>>) attributes {dimension_semantics = [#tpu.dimension_semantics<parallel>, #tpu.dimension_semantics<arbitrary>], iteration_bounds = array<i64: 2, 1>, scalar_prefetch = 0 : i64, scratch_operands = 2 : i64, tpu.core_type = #tpu.core_type<tc>, window_params = [{transform_indices = @transform_0, window_bounds = array<i64: 1, 16, 16, 4>}, {transform_indices = @transform_1, window_bounds = array<i64: 1, 1, 4>}, {transform_indices = @transform_2, window_bounds = array<i64: 36, 128>}, {transform_indices = @transform_3, window_bounds = array<i64: 1, 1, 128>}, {transform_indices = @transform_4, window_bounds = array<i64: 1, 256, 128>}]} {
    %c0_i32 = arith.constant 0 : i32
    %0 = arith.cmpi eq, %arg1, %c0_i32 : i32
    %1 = arith.extui %0 : i1 to i32
    %c0_i32_0 = arith.constant 0 : i32
    %2 = arith.cmpi ne, %1, %c0_i32_0 : i32
    scf.if %2 {
      %c0_10 = arith.constant 0 : index
      %c0_11 = arith.constant 0 : index
      %c0_12 = arith.constant 0 : index
      %13 = vector.load %arg3[%c0_10, %c0_11, %c0_12] : memref<1x1x4xf32, #tpu.memory_space<vmem>>, vector<1x1x4xf32>
      %14 = vector.shape_cast %13 : vector<1x1x4xf32> to vector<1x4xf32>
      %cst_13 = arith.constant 0.000000e+00 : f32
      %15 = vector.broadcast %cst_13 : f32 to vector<18x18x4xf32>
      %c0_14 = arith.constant 0 : index
      %c0_15 = arith.constant 0 : index
      %c0_16 = arith.constant 0 : index
      %16 = vector.load %arg7[%c0_14, %c0_15, %c0_16] : memref<18x18x4xf32, #tpu.memory_space<vmem>>, vector<18x18x4xf32>
      tpu.vector_store %arg7[%c0_14, %c0_15, %c0_16], %15 {strides = array<i32>} : memref<18x18x4xf32, #tpu.memory_space<vmem>>, vector<18x18x4xf32>,
      %c0_17 = arith.constant 0 : index
      %c0_18 = arith.constant 0 : index
      %c0_19 = arith.constant 0 : index
      %c0_20 = arith.constant 0 : index
      %17 = vector.load %arg2[%c0_17, %c0_18, %c0_19, %c0_20] : memref<1x16x16x4xf32, #tpu.memory_space<vmem>>, vector<1x16x16x4xf32>
      %18 = vector.shape_cast %17 : vector<1x16x16x4xf32> to vector<16x16x4xf32>
      %19 = vector.shape_cast %14 : vector<1x4xf32> to vector<1x1x4xf32>
      %20 = vector.broadcast %19 : vector<1x1x4xf32> to vector<16x16x4xf32>
      %21 = arith.mulf %18, %20 : vector<16x16x4xf32>
      %c1 = arith.constant 1 : index
      %c1_21 = arith.constant 1 : index
      %c0_22 = arith.constant 0 : index
      %22 = vector.load %arg7[%c1, %c1_21, %c0_22] : memref<18x18x4xf32, #tpu.memory_space<vmem>>, vector<16x16x4xf32>
      tpu.vector_store %arg7[%c1, %c1_21, %c0_22], %21 {strides = array<i32>} : memref<18x18x4xf32, #tpu.memory_space<vmem>>, vector<16x16x4xf32>,
      %c0_23 = arith.constant 0 : index
      %c0_24 = arith.constant 0 : index
      %c0_25 = arith.constant 0 : index
      %23 = vector.load %arg7[%c0_23, %c0_24, %c0_25] : memref<18x18x4xf32, #tpu.memory_space<vmem>>, vector<16x16x4xf32>
      %24 = vector.shape_cast %23 : vector<16x16x4xf32> to vector<256x4xf32>
      %c0_26 = arith.constant 0 : index
      %c0_27 = arith.constant 0 : index
      %25 = vector.load %arg8[%c0_26, %c0_27] : memref<256x36xf32, #tpu.memory_space<vmem>>, vector<256x4xf32>
      tpu.vector_store %arg8[%c0_26, %c0_27], %24 {strides = array<i32>} : memref<256x36xf32, #tpu.memory_space<vmem>>, vector<256x4xf32>,
      %c0_28 = arith.constant 0 : index
      %c1_29 = arith.constant 1 : index
      %c0_30 = arith.constant 0 : index
      %26 = vector.load %arg7[%c0_28, %c1_29, %c0_30] : memref<18x18x4xf32, #tpu.memory_space<vmem>>, vector<16x16x4xf32>
      %27 = vector.shape_cast %26 : vector<16x16x4xf32> to vector<256x4xf32>
      %c0_31 = arith.constant 0 : index
      %c4 = arith.constant 4 : index
      %28 = vector.load %arg8[%c0_31, %c4] : memref<256x36xf32, #tpu.memory_space<vmem>>, vector<256x4xf32>
      tpu.vector_store %arg8[%c0_31, %c4], %27 {strides = array<i32>} : memref<256x36xf32, #tpu.memory_space<vmem>>, vector<256x4xf32>,
      %c0_32 = arith.constant 0 : index
      %c2 = arith.constant 2 : index
      %c0_33 = arith.constant 0 : index
      %29 = vector.load %arg7[%c0_32, %c2, %c0_33] : memref<18x18x4xf32, #tpu.memory_space<vmem>>, vector<16x16x4xf32>
      %30 = vector.shape_cast %29 : vector<16x16x4xf32> to vector<256x4xf32>
      %c0_34 = arith.constant 0 : index
      %c8 = arith.constant 8 : index
      %31 = vector.load %arg8[%c0_34, %c8] : memref<256x36xf32, #tpu.memory_space<vmem>>, vector<256x4xf32>
      tpu.vector_store %arg8[%c0_34, %c8], %30 {strides = array<i32>} : memref<256x36xf32, #tpu.memory_space<vmem>>, vector<256x4xf32>,
      %c1_35 = arith.constant 1 : index
      %c0_36 = arith.constant 0 : index
      %c0_37 = arith.constant 0 : index
      %32 = vector.load %arg7[%c1_35, %c0_36, %c0_37] : memref<18x18x4xf32, #tpu.memory_space<vmem>>, vector<16x16x4xf32>
      %33 = vector.shape_cast %32 : vector<16x16x4xf32> to vector<256x4xf32>
      %c0_38 = arith.constant 0 : index
      %c12 = arith.constant 12 : index
      %34 = vector.load %arg8[%c0_38, %c12] : memref<256x36xf32, #tpu.memory_space<vmem>>, vector<256x4xf32>
      tpu.vector_store %arg8[%c0_38, %c12], %33 {strides = array<i32>} : memref<256x36xf32, #tpu.memory_space<vmem>>, vector<256x4xf32>,
      %c1_39 = arith.constant 1 : index
      %c1_40 = arith.constant 1 : index
      %c0_41 = arith.constant 0 : index
      %35 = vector.load %arg7[%c1_39, %c1_40, %c0_41] : memref<18x18x4xf32, #tpu.memory_space<vmem>>, vector<16x16x4xf32>
      %36 = vector.shape_cast %35 : vector<16x16x4xf32> to vector<256x4xf32>
      %c0_42 = arith.constant 0 : index
      %c16 = arith.constant 16 : index
      %37 = vector.load %arg8[%c0_42, %c16] : memref<256x36xf32, #tpu.memory_space<vmem>>, vector<256x4xf32>
      tpu.vector_store %arg8[%c0_42, %c16], %36 {strides = array<i32>} : memref<256x36xf32, #tpu.memory_space<vmem>>, vector<256x4xf32>,
      %c1_43 = arith.constant 1 : index
      %c2_44 = arith.constant 2 : index
      %c0_45 = arith.constant 0 : index
      %38 = vector.load %arg7[%c1_43, %c2_44, %c0_45] : memref<18x18x4xf32, #tpu.memory_space<vmem>>, vector<16x16x4xf32>
      %39 = vector.shape_cast %38 : vector<16x16x4xf32> to vector<256x4xf32>
      %c0_46 = arith.constant 0 : index
      %c20 = arith.constant 20 : index
      %40 = vector.load %arg8[%c0_46, %c20] : memref<256x36xf32, #tpu.memory_space<vmem>>, vector<256x4xf32>
      tpu.vector_store %arg8[%c0_46, %c20], %39 {strides = array<i32>} : memref<256x36xf32, #tpu.memory_space<vmem>>, vector<256x4xf32>,
      %c2_47 = arith.constant 2 : index
      %c0_48 = arith.constant 0 : index
      %c0_49 = arith.constant 0 : index
      %41 = vector.load %arg7[%c2_47, %c0_48, %c0_49] : memref<18x18x4xf32, #tpu.memory_space<vmem>>, vector<16x16x4xf32>
      %42 = vector.shape_cast %41 : vector<16x16x4xf32> to vector<256x4xf32>
      %c0_50 = arith.constant 0 : index
      %c24 = arith.constant 24 : index
      %43 = vector.load %arg8[%c0_50, %c24] : memref<256x36xf32, #tpu.memory_space<vmem>>, vector<256x4xf32>
      tpu.vector_store %arg8[%c0_50, %c24], %42 {strides = array<i32>} : memref<256x36xf32, #tpu.memory_space<vmem>>, vector<256x4xf32>,
      %c2_51 = arith.constant 2 : index
      %c1_52 = arith.constant 1 : index
      %c0_53 = arith.constant 0 : index
      %44 = vector.load %arg7[%c2_51, %c1_52, %c0_53] : memref<18x18x4xf32, #tpu.memory_space<vmem>>, vector<16x16x4xf32>
      %45 = vector.shape_cast %44 : vector<16x16x4xf32> to vector<256x4xf32>
      %c0_54 = arith.constant 0 : index
      %c28 = arith.constant 28 : index
      %46 = vector.load %arg8[%c0_54, %c28] : memref<256x36xf32, #tpu.memory_space<vmem>>, vector<256x4xf32>
      tpu.vector_store %arg8[%c0_54, %c28], %45 {strides = array<i32>} : memref<256x36xf32, #tpu.memory_space<vmem>>, vector<256x4xf32>,
      %c2_55 = arith.constant 2 : index
      %c2_56 = arith.constant 2 : index
      %c0_57 = arith.constant 0 : index
      %47 = vector.load %arg7[%c2_55, %c2_56, %c0_57] : memref<18x18x4xf32, #tpu.memory_space<vmem>>, vector<16x16x4xf32>
      %48 = vector.shape_cast %47 : vector<16x16x4xf32> to vector<256x4xf32>
      %c0_58 = arith.constant 0 : index
      %c32 = arith.constant 32 : index
      %49 = vector.load %arg8[%c0_58, %c32] : memref<256x36xf32, #tpu.memory_space<vmem>>, vector<256x4xf32>
      tpu.vector_store %arg8[%c0_58, %c32], %48 {strides = array<i32>} : memref<256x36xf32, #tpu.memory_space<vmem>>, vector<256x4xf32>,
    } else {
    }
    %c0 = arith.constant 0 : index
    %c0_1 = arith.constant 0 : index
    %3 = vector.load %arg8[%c0, %c0_1] : memref<256x36xf32, #tpu.memory_space<vmem>>, vector<256x36xf32>
    %c0_2 = arith.constant 0 : index
    %c0_3 = arith.constant 0 : index
    %4 = vector.load %arg4[%c0_2, %c0_3] : memref<36x128xf32, #tpu.memory_space<vmem>>, vector<36x128xf32>
    %cst = arith.constant dense<0.000000e+00> : vector<256x128xf32>
    %5 = tpu.matmul %3, %4, %cst {dimension_numbers = #tpu.dot_dimension_numbers<[1], [0], [0], [1], [0, 0, 1, 1], [], []>} : vector<256x36xf32>, vector<36x128xf32>, vector<256x128xf32> -> vector<256x128xf32>
    %c0_4 = arith.constant 0 : index
    %c0_5 = arith.constant 0 : index
    %c0_6 = arith.constant 0 : index
    %6 = vector.load %arg5[%c0_4, %c0_5, %c0_6] : memref<1x1x128xf32, #tpu.memory_space<vmem>>, vector<1x1x128xf32>
    %7 = vector.shape_cast %6 : vector<1x1x128xf32> to vector<1x128xf32>
    %8 = vector.broadcast %7 : vector<1x128xf32> to vector<256x128xf32>
    %9 = arith.mulf %5, %8 : vector<256x128xf32>
    %c0_7 = arith.constant 0 : index
    %c0_8 = arith.constant 0 : index
    %c0_9 = arith.constant 0 : index
    %10 = vector.load %arg6[%c0_7, %c0_8, %c0_9] : memref<1x256x128xf32, #tpu.memory_space<vmem>>, vector<1x256x128xf32>
    %11 = vector.shape_cast %10 : vector<1x256x128xf32> to vector<256x128xf32>
    %12 = vector.shape_cast %9 : vector<256x128xf32> to vector<1x256x128xf32>
    tpu.vector_store %arg6[%c0_7, %c0_8, %c0_9], %12 {strides = array<i32>} : memref<1x256x128xf32, #tpu.memory_space<vmem>>, vector<1x256x128xf32>,
    return
  }
  func.func @transform_0(%arg0: i32, %arg1: i32) -> (i32, i32, i32, i32) {
    %c0_i32 = arith.constant 0 : i32
    %c0_i32_0 = arith.constant 0 : i32
    %c0_i32_1 = arith.constant 0 : i32
    %c0_i32_2 = arith.constant 0 : i32
    return %arg0, %c0_i32, %c0_i32_0, %c0_i32_1 : i32, i32, i32, i32
  }
  func.func @transform_1(%arg0: i32, %arg1: i32) -> (i32, i32, i32) {
    %c0_i32 = arith.constant 0 : i32
    %c0_i32_0 = arith.constant 0 : i32
    %c0_i32_1 = arith.constant 0 : i32
    return %arg0, %c0_i32, %c0_i32_0 : i32, i32, i32
  }
  func.func @transform_2(%arg0: i32, %arg1: i32) -> (i32, i32) {
    %c0_i32 = arith.constant 0 : i32
    %c0_i32_0 = arith.constant 0 : i32
    return %c0_i32, %arg1 : i32, i32
  }
  func.func @transform_3(%arg0: i32, %arg1: i32) -> (i32, i32, i32) {
    %c0_i32 = arith.constant 0 : i32
    %c0_i32_0 = arith.constant 0 : i32
    return %arg0, %c0_i32, %arg1 : i32, i32, i32
  }
  func.func @transform_4(%arg0: i32, %arg1: i32) -> (i32, i32, i32) {
    %c0_i32 = arith.constant 0 : i32
    %c0_i32_0 = arith.constant 0 : i32
    return %arg0, %c0_i32, %arg1 : i32, i32, i32
  }
}

</mosaic_0001>

<llo_original>
// kernel: tpu_custom_call.1
$region0: #{tpu_custom_call.1}
  #allocation0 [shape = 'u32[]', space=smem, size = 0x4, offset = 0x4, fixed_abs, tag = 'smem constant byte address 0x4 - core index']
  #allocation1 [shape = 'u32[144,128]{1,0:T(1,128)}', space=vmem, size = 0x12000, scoped, tag = 'internal scratch']
  #allocation2 [shape = 'f32[18,18,4]{2,1,0:T(8,128)}', space=vmem, size = 0x36000, scoped, tag = 'scratch operand']
  #allocation3 [shape = 'f32[256,36]{1,0:T(8,128)}', space=vmem, size = 0x20000, scoped, tag = 'scratch operand']
  %s0 = inlined_call_operand.vmem [shape: f32[2,16,16,4], index: 0, kind: input, shape index: {}]
  %s1 = inlined_call_operand.vmem [shape: f32[2,1,4], index: 1, kind: input, shape index: {}]
  %s2 = inlined_call_operand.vmem [shape: f32[36,128], index: 2, kind: input, shape index: {}]
  %s3 = inlined_call_operand.vmem [shape: f32[2,1,128], index: 3, kind: input, shape index: {}]
  %s4 = inlined_call_operand.hbm [shape: f32[2,256,128], index: 4, kind: output, shape index: {}]
  %s5 = sld [smem:[#allocation0]]
  $region53: #{tpu_custom_call.1} parent=0
    _
  %s7 = ssub.s32 1, %s5
  %s8 = scalar_select 0, %s7, %s5
  $region1: #{tpu_custom_call.1} parent=0
    #allocation4 [shape = 'u8[262144]{0}', space=vmem, size = 0x40000, scoped, tag = 'output window, operand 0']
    #allocation5 [shape = 's32[2]{0}', space=sflag, size = 0x8, scoped, tag = 'scoped memory for tpu_custom_call.1']
    %9 = vsyncpa [#allocation5], 0
    %s10 = scalar_lea.sflag [#allocation5], 1
    %11 = vsyncpa %s10, 0
    loop: start=0, step=1, limit=4
    $region2: #{tpu_custom_call.1} parent=1 // loop_pre_header
      _
    $region3: #{tpu_custom_call.1} parent=1 // loop_header
      %s13 = sphi 0, %s17
      %p14 = scmp.ge.s32.totalorder %s13, 4
      %s20 = sphi 0, %s32
      %s21 = sphi 0, %s28
      %s22 = sphi 0, %s20
      %s23 = sphi 0, %s21
      %s24 = sphi 0, %s22
      %s25 = sphi 0, %s23
      %s35 = sphi 0, %s37
      %s38 = sphi 0, %s35
      %s39 = sphi 0, %s38
      %s55 = sphi 0, %s39
      %s61 = sphi 0, %s63
      %s64 = sphi 0, %s61
      %s65 = sphi 0, %s64
      %s81 = sphi 0, %s65
      %s87 = sphi 0, %s89
      %s90 = sphi 0, %s87
      %s91 = sphi 0, %s90
      %s107 = sphi 0, %s91
      %s115 = sphi 0, %s117
      %s118 = sphi 0, %s115
      %s119 = sphi 0, %s118
      %s135 = sphi 0, %s119
      %s143 = sphi 0, %s145
      %s146 = sphi 0, %s143
      %s147 = sphi 0, %s146
      %s163 = sphi 0, %s147
    $region4: #{tpu_custom_call.1} parent=1 // loop_header_branch
      %16 = sbr.rel (%p14) target = $region8
    $region5: #{tpu_custom_call.1} parent=1 // loop_body
      %s18 = ssub.s32 %s13, 1
      %s19 = ssub.s32 %s13, 2
      %s26 = sadd.s32 1, %s21
      %p27 = scmp.ge.s32.totalorder %s26, 1
      %s28 = scalar_select %p27, 0, %s26
      %s29 = sadd.s32 1, %s20
      %s30 = scalar_select %p27, %s29, %s20
      %p31 = scmp.ge.s32.totalorder %s30, 2
      %s32 = scalar_select %p31, 0, %s30
      %s33 = ssub.s32 %s20, %s32
      %p34 = scmp.eq.s32.totalorder %s33, 0
      %s36 = sadd.s32 %s35, 1
      %s37 = scalar_select %p34, %s35, %s36
      %p40 = pneg %p34
      %p41 = scmp.eq.s32.totalorder %s13, 1
      %p42 = por %p40, %p41
      %p43 = scmp.ne.s32.totalorder %s35, %s38
      %p44 = scmp.eq.s32.totalorder %s13, 0
      %p45 = por %p43, %p44
      %p46 = scmp.ne.s32.totalorder %s35, %s38
      %p47 = scmp.eq.s32.totalorder %s18, 1
      %p48 = por %p46, %p47
      %p49 = scmp.ne.s32.totalorder %s38, %s39
      %p50 = scmp.eq.s32.totalorder %s18, 0
      %p51 = por %p49, %p50
      %p52 = scmp.ne.s32.totalorder %s38, %s39
      %p53 = scmp.eq.s32.totalorder %s19, 1
      %p54 = por %p52, %p53
      %p56 = scmp.ne.s32.totalorder %s39, %s55
      %p57 = scmp.eq.s32.totalorder %s19, 0
      %p58 = por %p56, %p57
      %s59 = ssub.s32 %s20, %s32
      %p60 = scmp.eq.s32.totalorder %s59, 0
      %s62 = sadd.s32 %s61, 1
      %s63 = scalar_select %p60, %s61, %s62
      %p66 = pneg %p60
      %p67 = scmp.eq.s32.totalorder %s13, 1
      %p68 = por %p66, %p67
      %p69 = scmp.ne.s32.totalorder %s61, %s64
      %p70 = scmp.eq.s32.totalorder %s13, 0
      %p71 = por %p69, %p70
      %p72 = scmp.ne.s32.totalorder %s61, %s64
      %p73 = scmp.eq.s32.totalorder %s18, 1
      %p74 = por %p72, %p73
      %p75 = scmp.ne.s32.totalorder %s64, %s65
      %p76 = scmp.eq.s32.totalorder %s18, 0
      %p77 = por %p75, %p76
      %p78 = scmp.ne.s32.totalorder %s64, %s65
      %p79 = scmp.eq.s32.totalorder %s19, 1
      %p80 = por %p78, %p79
      %p82 = scmp.ne.s32.totalorder %s65, %s81
      %p83 = scmp.eq.s32.totalorder %s19, 0
      %p84 = por %p82, %p83
      %s85 = ssub.s32 %s21, %s28
      %p86 = scmp.eq.s32.totalorder %s85, 0
      %s88 = sadd.s32 %s87, 1
      %s89 = scalar_select %p86, %s87, %s88
      %p92 = pneg %p86
      %p93 = scmp.eq.s32.totalorder %s13, 1
      %p94 = por %p92, %p93
      %p95 = scmp.ne.s32.totalorder %s87, %s90
      %p96 = scmp.eq.s32.totalorder %s13, 0
      %p97 = por %p95, %p96
      %p98 = scmp.ne.s32.totalorder %s87, %s90
      %p99 = scmp.eq.s32.totalorder %s18, 1
      %p100 = por %p98, %p99
      %p101 = scmp.ne.s32.totalorder %s90, %s91
      %p102 = scmp.eq.s32.totalorder %s18, 0
      %p103 = por %p101, %p102
      %p104 = scmp.ne.s32.totalorder %s90, %s91
      %p105 = scmp.eq.s32.totalorder %s19, 1
      %p106 = por %p104, %p105
      %p108 = scmp.ne.s32.totalorder %s91, %s107
      %p109 = scmp.eq.s32.totalorder %s19, 0
      %p110 = por %p108, %p109
      %s111 = ssub.s32 %s20, %s32
      %s112 = ssub.s32 %s21, %s28
      %s113 = sor.u32 %s111, %s112
      %p114 = scmp.eq.s32.totalorder %s113, 0
      %s116 = sadd.s32 %s115, 1
      %s117 = scalar_select %p114, %s115, %s116
      %p120 = pneg %p114
      %p121 = scmp.eq.s32.totalorder %s13, 1
      %p122 = por %p120, %p121
      %p123 = scmp.ne.s32.totalorder %s115, %s118
      %p124 = scmp.eq.s32.totalorder %s13, 0
      %p125 = por %p123, %p124
      %p126 = scmp.ne.s32.totalorder %s115, %s118
      %p127 = scmp.eq.s32.totalorder %s18, 1
      %p128 = por %p126, %p127
      %p129 = scmp.ne.s32.totalorder %s118, %s119
      %p130 = scmp.eq.s32.totalorder %s18, 0
      %p131 = por %p129, %p130
      %p132 = scmp.ne.s32.totalorder %s118, %s119
      %p133 = scmp.eq.s32.totalorder %s19, 1
      %p134 = por %p132, %p133
      %p136 = scmp.ne.s32.totalorder %s119, %s135
      %p137 = scmp.eq.s32.totalorder %s19, 0
      %p138 = por %p136, %p137
      %s139 = ssub.s32 %s20, %s32
      %s140 = ssub.s32 %s21, %s28
      %s141 = sor.u32 %s139, %s140
      %p142 = scmp.eq.s32.totalorder %s141, 0
      %s144 = sadd.s32 %s143, 1
      %s145 = scalar_select %p142, %s143, %s144
      %p148 = pneg %p142
      %p149 = scmp.eq.s32.totalorder %s13, 1
      %p150 = por %p148, %p149
      %p151 = scmp.ne.s32.totalorder %s143, %s146
      %p152 = scmp.eq.s32.totalorder %s13, 0
      %p153 = por %p151, %p152
      %p154 = scmp.ne.s32.totalorder %s143, %s146
      %p155 = scmp.eq.s32.totalorder %s18, 1
      %p156 = por %p154, %p155
      %p157 = scmp.ne.s32.totalorder %s146, %s147
      %p158 = scmp.eq.s32.totalorder %s18, 0
      %p159 = por %p157, %p158
      %p160 = scmp.ne.s32.totalorder %s146, %s147
      %p161 = scmp.eq.s32.totalorder %s19, 1
      %p162 = por %p160, %p161
      %p164 = scmp.ne.s32.totalorder %s147, %s163
      %p165 = scmp.eq.s32.totalorder %s19, 0
      %p166 = por %p164, %p165
      %p167 = scmp.le.s32.totalorder 1, %s13
      %p168 = scmp.lt.s32.totalorder %s13, 3
      %p169 = pnand %p167, %p168
      %p170 = pneg %p169
      // Predicated region
      $region9: #{tpu_custom_call.1} parent=5 // pred_check
        _
      $region10: #{tpu_custom_call.1} parent=5 // pred_check_branch
        %172 = sbr.rel (%p169) target = $region12
      $region11: #{tpu_custom_call.1} parent=5 // pred_region
        %s173 = ssub.s32 %s13, 1
        // Predicated region
        $region13: #{tpu_custom_call.1} parent=11 // pred_check
          %p174 = pneg %p103
        $region14: #{tpu_custom_call.1} parent=11 // pred_check_branch
          %176 = sbr.rel (%p174) target = $region16
        $region15: #{tpu_custom_call.1} parent=11 // pred_region
          %p177 = scmp.lt.s32.totalorder %s23, 0
          %s178 = scalar_select %p177, %s23, 0
          %s179 = smul.addr %s178, 8
          %s180 = scalar_lea.vmem %s2, %s179
        $region16: #{tpu_custom_call.1} parent=11 // pred_fallthru
          _
      $region12: #{tpu_custom_call.1} parent=5 // pred_fallthru
        _
      %p181 = scmp.lt.s32.totalorder %s13, 2
      // Predicated region
      $region17: #{tpu_custom_call.1} parent=5 // pred_check
        %p182 = pneg %p181
      $region18: #{tpu_custom_call.1} parent=5 // pred_check_branch
        %184 = sbr.rel (%p182) target = $region20
      $region19: #{tpu_custom_call.1} parent=5 // pred_region
        // Predicated region
        $region21: #{tpu_custom_call.1} parent=19 // pred_check
          %p185 = pneg %p45
        $region22: #{tpu_custom_call.1} parent=19 // pred_check_branch
          %187 = sbr.rel (%p185) target = $region24
        $region23: #{tpu_custom_call.1} parent=19 // pred_region
          %p188 = scmp.lt.s32.totalorder %s20, 1
          %s189 = scalar_select %p188, %s20, 1
          %s190 = smul.addr %s189, 32
          %s191 = smul.addr %s190, 8
          %s192 = scalar_lea.vmem %s0, %s191
        $region24: #{tpu_custom_call.1} parent=19 // pred_fallthru
          _
        // Predicated region
        $region25: #{tpu_custom_call.1} parent=19 // pred_check
          %p193 = pneg %p71
        $region26: #{tpu_custom_call.1} parent=19 // pred_check_branch
          %195 = sbr.rel (%p193) target = $region28
        $region27: #{tpu_custom_call.1} parent=19 // pred_region
          %p196 = scmp.lt.s32.totalorder %s20, 1
          %s197 = scalar_select %p196, %s20, 1
          %s198 = scalar_lea.vmem %s1, %s197
        $region28: #{tpu_custom_call.1} parent=19 // pred_fallthru
          _
        // Predicated region
        $region29: #{tpu_custom_call.1} parent=19 // pred_check
          %p199 = pneg %p125
        $region30: #{tpu_custom_call.1} parent=19 // pred_check_branch
          %201 = sbr.rel (%p199) target = $region32
        $region31: #{tpu_custom_call.1} parent=19 // pred_region
          %p202 = scmp.lt.s32.totalorder %s20, 1
          %s203 = scalar_select %p202, %s20, 1
          %p204 = scmp.lt.s32.totalorder %s21, 0
          %s205 = scalar_select %p204, %s21, 0
          %s206 = sadd.s32 %s205, %s203
          %s207 = scalar_lea.vmem %s3, %s206
        $region32: #{tpu_custom_call.1} parent=19 // pred_fallthru
          _
      $region20: #{tpu_custom_call.1} parent=5 // pred_fallthru
        _
      %p208 = scmp.le.s32.totalorder 1, %s13
      %p209 = scmp.lt.s32.totalorder %s13, 3
      %p210 = pnand %p208, %p209
      %p211 = pneg %p210
      // Predicated region
      $region33: #{tpu_custom_call.1} parent=5 // pred_check
        _
      $region34: #{tpu_custom_call.1} parent=5 // pred_check_branch
        %213 = sbr.rel (%p210) target = $region36
      $region35: #{tpu_custom_call.1} parent=5 // pred_region
        %s214 = ssub.s32 %s13, 1
        %p215 = scmp.lt.s32.totalorder %s22, 1
        %s216 = scalar_select %p215, %s22, 1
        %s217 = smul.addr %s216, 32
        %s218 = smul.addr %s217, 8
        %s219 = scalar_lea.vmem %s0, %s218
        %p220 = pneg %p51
        %p221 = pneg %p48
        %p222 = scmp.lt.s32.totalorder %s22, 1
        %s223 = scalar_select %p222, %s22, 1
        %s224 = scalar_lea.vmem %s1, %s223
        %p225 = pneg %p77
        %p226 = pneg %p74
        %p227 = scmp.lt.s32.totalorder %s23, 0
        %s228 = scalar_select %p227, %s23, 0
        %s229 = smul.addr %s228, 8
        %s230 = scalar_lea.vmem %s2, %s229
        %p231 = pneg %p103
        %p232 = pneg %p100
        %p233 = scmp.lt.s32.totalorder %s22, 1
        %s234 = scalar_select %p233, %s22, 1
        %p235 = scmp.lt.s32.totalorder %s23, 0
        %s236 = scalar_select %p235, %s23, 0
        %s237 = sadd.s32 %s236, %s234
        %s238 = scalar_lea.vmem %s3, %s237
        %p239 = pneg %p131
        %p240 = pneg %p128
        %p241 = pneg %p159
        %p242 = pneg %p156
        %s243 = sand.u32 %s146, 1
        %s244 = scalar_lea.sflag [#allocation5], %s243
        %s245 = sand.u32 %s146, 1
        %s246 = smul.addr %s245, 256
        %s247 = scalar_lea.vmem [#allocation4], %s246
        %p248 = scmp.lt.s32.totalorder %s22, 1
        %s249 = scalar_select %p248, %s22, 1
        %s250 = smul.addr %s249, 32
        %s251 = smul.addr %s250, 8
        %s252 = scalar_lea.vmem %s0, %s251
        %p253 = scmp.lt.s32.totalorder %s22, 1
        %s254 = scalar_select %p253, %s22, 1
        %s255 = scalar_lea.vmem %s1, %s254
        %p256 = scmp.lt.s32.totalorder %s23, 0
        %s257 = scalar_select %p256, %s23, 0
        %s258 = smul.addr %s257, 8
        %s259 = scalar_lea.vmem %s2, %s258
        %p260 = scmp.lt.s32.totalorder %s22, 1
        %s261 = scalar_select %p260, %s22, 1
        %p262 = scmp.lt.s32.totalorder %s23, 0
        %s263 = scalar_select %p262, %s23, 0
        %s264 = sadd.s32 %s263, %s261
        %s265 = scalar_lea.vmem %s3, %s264
        %p266 = scmp.eq.s32.totalorder %s23, 0
        // Predicated region
        $region37: #{tpu_custom_call.1} parent=35 // pred_check
          %p267 = pneg %p266
        $region38: #{tpu_custom_call.1} parent=35 // pred_check_branch
          %269 = sbr.rel (%p267) target = $region40
        $region39: #{tpu_custom_call.1} parent=35 // pred_region
          %v270 = vld [vmem:[%s255] sm:$0x1]
          %vm271 = vcmask 31744
          %272 = vst.msk [vmem:[#allocation2] sm:$0xff] %vm271, 0.0
          %273 = vst.msk [vmem:[#allocation2 + $0x8] sm:$0xff] %vm271, 0.0
          %vm274 = vcmask 25600
          %275 = vst.msk [vmem:[#allocation2 + $0x10] sm:$0x3] %vm274, 0.0
          %276 = vst.msk [vmem:[#allocation2 + $0x18] sm:$0xff] %vm271, 0.0
          %277 = vst.msk [vmem:[#allocation2 + $0x20] sm:$0xff] %vm271, 0.0
          %278 = vst.msk [vmem:[#allocation2 + $0x28] sm:$0x3] %vm274, 0.0
          %279 = vst.msk [vmem:[#allocation2 + $0x30] sm:$0xff] %vm271, 0.0
          %280 = vst.msk [vmem:[#allocation2 + $0x38] sm:$0xff] %vm271, 0.0
          %281 = vst.msk [vmem:[#allocation2 + $0x40] sm:$0x3] %vm274, 0.0
          %282 = vst.msk [vmem:[#allocation2 + $0x48] sm:$0xff] %vm271, 0.0
          %283 = vst.msk [vmem:[#allocation2 + $0x50] sm:$0xff] %vm271, 0.0
          %284 = vst.msk [vmem:[#allocation2 + $0x58] sm:$0x3] %vm274, 0.0
          %285 = vst.msk [vmem:[#allocation2 + $0x60] sm:$0xff] %vm271, 0.0
          %286 = vst.msk [vmem:[#allocation2 + $0x68] sm:$0xff] %vm271, 0.0
          %287 = vst.msk [vmem:[#allocation2 + $0x70] sm:$0x3] %vm274, 0.0
          %288 = vst.msk [vmem:[#allocation2 + $0x78] sm:$0xff] %vm271, 0.0
          %289 = vst.msk [vmem:[#allocation2 + $0x80] sm:$0xff] %vm271, 0.0
          %290 = vst.msk [vmem:[#allocation2 + $0x88] sm:$0x3] %vm274, 0.0
          %291 = vst.msk [vmem:[#allocation2 + $0x90] sm:$0xff] %vm271, 0.0
          %292 = vst.msk [vmem:[#allocation2 + $0x98] sm:$0xff] %vm271, 0.0
          %293 = vst.msk [vmem:[#allocation2 + $0xa0] sm:$0x3] %vm274, 0.0
          %294 = vst.msk [vmem:[#allocation2 + $0xa8] sm:$0xff] %vm271, 0.0
          %295 = vst.msk [vmem:[#allocation2 + $0xb0] sm:$0xff] %vm271, 0.0
          %296 = vst.msk [vmem:[#allocation2 + $0xb8] sm:$0x3] %vm274, 0.0
          %297 = vst.msk [vmem:[#allocation2 + $0xc0] sm:$0xff] %vm271, 0.0
          %298 = vst.msk [vmem:[#allocation2 + $0xc8] sm:$0xff] %vm271, 0.0
          %299 = vst.msk [vmem:[#allocation2 + $0xd0] sm:$0x3] %vm274, 0.0
          %300 = vst.msk [vmem:[#allocation2 + $0xd8] sm:$0xff] %vm271, 0.0
          %301 = vst.msk [vmem:[#allocation2 + $0xe0] sm:$0xff] %vm271, 0.0
          %302 = vst.msk [vmem:[#allocation2 + $0xe8] sm:$0x3] %vm274, 0.0
          %303 = vst.msk [vmem:[#allocation2 + $0xf0] sm:$0xff] %vm271, 0.0
          %304 = vst.msk [vmem:[#allocation2 + $0xf8] sm:$0xff] %vm271, 0.0
          %305 = vst.msk [vmem:[#allocation2 + $0x100] sm:$0x3] %vm274, 0.0
          %306 = vst.msk [vmem:[#allocation2 + $0x108] sm:$0xff] %vm271, 0.0
          %307 = vst.msk [vmem:[#allocation2 + $0x110] sm:$0xff] %vm271, 0.0
          %308 = vst.msk [vmem:[#allocation2 + $0x118] sm:$0x3] %vm274, 0.0
          %309 = vst.msk [vmem:[#allocation2 + $0x120] sm:$0xff] %vm271, 0.0
          %310 = vst.msk [vmem:[#allocation2 + $0x128] sm:$0xff] %vm271, 0.0
          %311 = vst.msk [vmem:[#allocation2 + $0x130] sm:$0x3] %vm274, 0.0
          %312 = vst.msk [vmem:[#allocation2 + $0x138] sm:$0xff] %vm271, 0.0
          %313 = vst.msk [vmem:[#allocation2 + $0x140] sm:$0xff] %vm271, 0.0
          %314 = vst.msk [vmem:[#allocation2 + $0x148] sm:$0x3] %vm274, 0.0
          %315 = vst.msk [vmem:[#allocation2 + $0x150] sm:$0xff] %vm271, 0.0
          %316 = vst.msk [vmem:[#allocation2 + $0x158] sm:$0xff] %vm271, 0.0
          %317 = vst.msk [vmem:[#allocation2 + $0x160] sm:$0x3] %vm274, 0.0
          %318 = vst.msk [vmem:[#allocation2 + $0x168] sm:$0xff] %vm271, 0.0
          %319 = vst.msk [vmem:[#allocation2 + $0x170] sm:$0xff] %vm271, 0.0
          %320 = vst.msk [vmem:[#allocation2 + $0x178] sm:$0x3] %vm274, 0.0
          %321 = vst.msk [vmem:[#allocation2 + $0x180] sm:$0xff] %vm271, 0.0
          %322 = vst.msk [vmem:[#allocation2 + $0x188] sm:$0xff] %vm271, 0.0
          %323 = vst.msk [vmem:[#allocation2 + $0x190] sm:$0x3] %vm274, 0.0
          %324 = vst.msk [vmem:[#allocation2 + $0x198] sm:$0xff] %vm271, 0.0
          %325 = vst.msk [vmem:[#allocation2 + $0x1a0] sm:$0xff] %vm271, 0.0
          %326 = vst.msk [vmem:[#allocation2 + $0x1a8] sm:$0x3] %vm274, 0.0
          %v327 = vld [vmem:[%s252] sm:$0xff]
          %v328 = vld [vmem:[%s252 + $0x8] sm:$0xff]
          %v329 = vld [vmem:[%s252 + $0x10] sm:$0xff]
          %v330 = vld [vmem:[%s252 + $0x18] sm:$0xff]
          %v331 = vld [vmem:[%s252 + $0x20] sm:$0xff]
          %v332 = vld [vmem:[%s252 + $0x28] sm:$0xff]
          %v333 = vld [vmem:[%s252 + $0x30] sm:$0xff]
          %v334 = vld [vmem:[%s252 + $0x38] sm:$0xff]
          %v335 = vld [vmem:[%s252 + $0x40] sm:$0xff]
          %v336 = vld [vmem:[%s252 + $0x48] sm:$0xff]
          %v337 = vld [vmem:[%s252 + $0x50] sm:$0xff]
          %v338 = vld [vmem:[%s252 + $0x58] sm:$0xff]
          %v339 = vld [vmem:[%s252 + $0x60] sm:$0xff]
          %v340 = vld [vmem:[%s252 + $0x68] sm:$0xff]
          %v341 = vld [vmem:[%s252 + $0x70] sm:$0xff]
          %v342 = vld [vmem:[%s252 + $0x78] sm:$0xff]
          %v343 = vld [vmem:[%s252 + $0x80] sm:$0xff]
          %v344 = vld [vmem:[%s252 + $0x88] sm:$0xff]
          %v345 = vld [vmem:[%s252 + $0x90] sm:$0xff]
          %v346 = vld [vmem:[%s252 + $0x98] sm:$0xff]
          %v347 = vld [vmem:[%s252 + $0xa0] sm:$0xff]
          %v348 = vld [vmem:[%s252 + $0xa8] sm:$0xff]
          %v349 = vld [vmem:[%s252 + $0xb0] sm:$0xff]
          %v350 = vld [vmem:[%s252 + $0xb8] sm:$0xff]
          %v351 = vld [vmem:[%s252 + $0xc0] sm:$0xff]
          %v352 = vld [vmem:[%s252 + $0xc8] sm:$0xff]
          %v353 = vld [vmem:[%s252 + $0xd0] sm:$0xff]
          %v354 = vld [vmem:[%s252 + $0xd8] sm:$0xff]
          %v355 = vld [vmem:[%s252 + $0xe0] sm:$0xff]
          %v356 = vld [vmem:[%s252 + $0xe8] sm:$0xff]
          %v357 = vld [vmem:[%s252 + $0xf0] sm:$0xff]
          %v358 = vld [vmem:[%s252 + $0xf8] sm:$0xff]
          %v360 = vlaneseq
          %v361 = vshrl.u32 %v360, 7
          %v362 = vsub.s32 0, %v361
          %v363 = vrot.slane %v270, %v362
          %v365 = vmul.f32 %v327, %v363
          %v366 = vmul.f32 %v328, %v363
          %v367 = vmul.f32 %v329, %v363
          %v368 = vmul.f32 %v330, %v363
          %v369 = vmul.f32 %v331, %v363
          %v370 = vmul.f32 %v332, %v363
          %v371 = vmul.f32 %v333, %v363
          %v372 = vmul.f32 %v334, %v363
          %v373 = vmul.f32 %v335, %v363
          %v374 = vmul.f32 %v336, %v363
          %v375 = vmul.f32 %v337, %v363
          %v376 = vmul.f32 %v338, %v363
          %v377 = vmul.f32 %v339, %v363
          %v378 = vmul.f32 %v340, %v363
          %v379 = vmul.f32 %v341, %v363
          %v380 = vmul.f32 %v342, %v363
          %v381 = vmul.f32 %v343, %v363
          %v382 = vmul.f32 %v344, %v363
          %v383 = vmul.f32 %v345, %v363
          %v384 = vmul.f32 %v346, %v363
          %v385 = vmul.f32 %v347, %v363
          %v386 = vmul.f32 %v348, %v363
          %v387 = vmul.f32 %v349, %v363
          %v388 = vmul.f32 %v350, %v363
          %v389 = vmul.f32 %v351, %v363
          %v390 = vmul.f32 %v352, %v363
          %v391 = vmul.f32 %v353, %v363
          %v392 = vmul.f32 %v354, %v363
          %v393 = vmul.f32 %v355, %v363
          %v394 = vmul.f32 %v356, %v363
          %v395 = vmul.f32 %v357, %v363
          %v396 = vmul.f32 %v358, %v363
          %s397 = scalar_lea.vmem [#allocation2], 24
          %398 = vst.msk [vmem:[%s397 + $0x1] sm:$0xff] %vm271, %v365
          %399 = vst.msk [vmem:[%s397 + $0x9] sm:$0xff] %vm271, %v366
          %400 = vst.msk [vmem:[%s397 + $0x19] sm:$0xff] %vm271, %v367
          %401 = vst.msk [vmem:[%s397 + $0x21] sm:$0xff] %vm271, %v368
          %402 = vst.msk [vmem:[%s397 + $0x31] sm:$0xff] %vm271, %v369
          %403 = vst.msk [vmem:[%s397 + $0x39] sm:$0xff] %vm271, %v370
          %404 = vst.msk [vmem:[%s397 + $0x49] sm:$0xff] %vm271, %v371
          %405 = vst.msk [vmem:[%s397 + $0x51] sm:$0xff] %vm271, %v372
          %406 = vst.msk [vmem:[%s397 + $0x61] sm:$0xff] %vm271, %v373
          %407 = vst.msk [vmem:[%s397 + $0x69] sm:$0xff] %vm271, %v374
          %408 = vst.msk [vmem:[%s397 + $0x79] sm:$0xff] %vm271, %v375
          %409 = vst.msk [vmem:[%s397 + $0x81] sm:$0xff] %vm271, %v376
          %410 = vst.msk [vmem:[%s397 + $0x91] sm:$0xff] %vm271, %v377
          %411 = vst.msk [vmem:[%s397 + $0x99] sm:$0xff] %vm271, %v378
          %412 = vst.msk [vmem:[%s397 + $0xa9] sm:$0xff] %vm271, %v379
          %413 = vst.msk [vmem:[%s397 + $0xb1] sm:$0xff] %vm271, %v380
          %414 = vst.msk [vmem:[%s397 + $0xc1] sm:$0xff] %vm271, %v381
          %415 = vst.msk [vmem:[%s397 + $0xc9] sm:$0xff] %vm271, %v382
          %416 = vst.msk [vmem:[%s397 + $0xd9] sm:$0xff] %vm271, %v383
          %417 = vst.msk [vmem:[%s397 + $0xe1] sm:$0xff] %vm271, %v384
          %418 = vst.msk [vmem:[%s397 + $0xf1] sm:$0xff] %vm271, %v385
          %419 = vst.msk [vmem:[%s397 + $0xf9] sm:$0xff] %vm271, %v386
          %420 = vst.msk [vmem:[%s397 + $0x109] sm:$0xff] %vm271, %v387
          %421 = vst.msk [vmem:[%s397 + $0x111] sm:$0xff] %vm271, %v388
          %422 = vst.msk [vmem:[%s397 + $0x121] sm:$0xff] %vm271, %v389
          %423 = vst.msk [vmem:[%s397 + $0x129] sm:$0xff] %vm271, %v390
          %424 = vst.msk [vmem:[%s397 + $0x139] sm:$0xff] %vm271, %v391
          %425 = vst.msk [vmem:[%s397 + $0x141] sm:$0xff] %vm271, %v392
          %426 = vst.msk [vmem:[%s397 + $0x151] sm:$0xff] %vm271, %v393
          %427 = vst.msk [vmem:[%s397 + $0x159] sm:$0xff] %vm271, %v394
          %428 = vst.msk [vmem:[%s397 + $0x169] sm:$0xff] %vm271, %v395
          %429 = vst.msk [vmem:[%s397 + $0x171] sm:$0xff] %vm271, %v396
          %v430 = vld [vmem:[#allocation2] sm:$0xff]
          %v431 = vld [vmem:[#allocation2 + $0x8] sm:$0xff]
          %v432 = vld [vmem:[#allocation2 + $0x18] sm:$0xff]
          %v433 = vld [vmem:[#allocation2 + $0x20] sm:$0xff]
          %v434 = vld [vmem:[#allocation2 + $0x30] sm:$0xff]
          %v435 = vld [vmem:[#allocation2 + $0x38] sm:$0xff]
          %v436 = vld [vmem:[#allocation2 + $0x48] sm:$0xff]
          %v437 = vld [vmem:[#allocation2 + $0x50] sm:$0xff]
          %v438 = vld [vmem:[#allocation2 + $0x60] sm:$0xff]
          %v439 = vld [vmem:[#allocation2 + $0x68] sm:$0xff]
          %v440 = vld [vmem:[#allocation2 + $0x78] sm:$0xff]
          %v441 = vld [vmem:[#allocation2 + $0x80] sm:$0xff]
          %v442 = vld [vmem:[#allocation2 + $0x90] sm:$0xff]
          %v443 = vld [vmem:[#allocation2 + $0x98] sm:$0xff]
          %v444 = vld [vmem:[#allocation2 + $0xa8] sm:$0xff]
          %v445 = vld [vmem:[#allocation2 + $0xb0] sm:$0xff]
          %v446 = vld [vmem:[#allocation2 + $0xc0] sm:$0xff]
          %v447 = vld [vmem:[#allocation2 + $0xc8] sm:$0xff]
          %v448 = vld [vmem:[#allocation2 + $0xd8] sm:$0xff]
          %v449 = vld [vmem:[#allocation2 + $0xe0] sm:$0xff]
          %v450 = vld [vmem:[#allocation2 + $0xf0] sm:$0xff]
          %v451 = vld [vmem:[#allocation2 + $0xf8] sm:$0xff]
          %v452 = vld [vmem:[#allocation2 + $0x108] sm:$0xff]
          %v453 = vld [vmem:[#allocation2 + $0x110] sm:$0xff]
          %v454 = vld [vmem:[#allocation2 + $0x120] sm:$0xff]
          %v455 = vld [vmem:[#allocation2 + $0x128] sm:$0xff]
          %v456 = vld [vmem:[#allocation2 + $0x138] sm:$0xff]
          %v457 = vld [vmem:[#allocation2 + $0x140] sm:$0xff]
          %v458 = vld [vmem:[#allocation2 + $0x150] sm:$0xff]
          %v459 = vld [vmem:[#allocation2 + $0x158] sm:$0xff]
          %v460 = vld [vmem:[#allocation2 + $0x168] sm:$0xff]
          %v461 = vld [vmem:[#allocation2 + $0x170] sm:$0xff]
          %462 = vst.msk [vmem:[#allocation3] sm:$0xff] %vm271, %v430
          %463 = vst.msk [vmem:[#allocation3 + $0x8] sm:$0xff] %vm271, %v431
          %464 = vst.msk [vmem:[#allocation3 + $0x10] sm:$0xff] %vm271, %v432
          %465 = vst.msk [vmem:[#allocation3 + $0x18] sm:$0xff] %vm271, %v433
          %466 = vst.msk [vmem:[#allocation3 + $0x20] sm:$0xff] %vm271, %v434
          %467 = vst.msk [vmem:[#allocation3 + $0x28] sm:$0xff] %vm271, %v435
          %468 = vst.msk [vmem:[#allocation3 + $0x30] sm:$0xff] %vm271, %v436
          %469 = vst.msk [vmem:[#allocation3 + $0x38] sm:$0xff] %vm271, %v437
          %470 = vst.msk [vmem:[#allocation3 + $0x40] sm:$0xff] %vm271, %v438
          %471 = vst.msk [vmem:[#allocation3 + $0x48] sm:$0xff] %vm271, %v439
          %472 = vst.msk [vmem:[#allocation3 + $0x50] sm:$0xff] %vm271, %v440
          %473 = vst.msk [vmem:[#allocation3 + $0x58] sm:$0xff] %vm271, %v441
          %474 = vst.msk [vmem:[#allocation3 + $0x60] sm:$0xff] %vm271, %v442
          %475 = vst.msk [vmem:[#allocation3 + $0x68] sm:$0xff] %vm271, %v443
          %476 = vst.msk [vmem:[#allocation3 + $0x70] sm:$0xff] %vm271, %v444
          %477 = vst.msk [vmem:[#allocation3 + $0x78] sm:$0xff] %vm271, %v445
          %478 = vst.msk [vmem:[#allocation3 + $0x80] sm:$0xff] %vm271, %v446
          %479 = vst.msk [vmem:[#allocation3 + $0x88] sm:$0xff] %vm271, %v447
          %480 = vst.msk [vmem:[#allocation3 + $0x90] sm:$0xff] %vm271, %v448
          %481 = vst.msk [vmem:[#allocation3 + $0x98] sm:$0xff] %vm271, %v449
          %482 = vst.msk [vmem:[#allocation3 + $0xa0] sm:$0xff] %vm271, %v450
          %483 = vst.msk [vmem:[#allocation3 + $0xa8] sm:$0xff] %vm271, %v451
          %484 = vst.msk [vmem:[#allocation3 + $0xb0] sm:$0xff] %vm271, %v452
          %485 = vst.msk [vmem:[#allocation3 + $0xb8] sm:$0xff] %vm271, %v453
          %486 = vst.msk [vmem:[#allocation3 + $0xc0] sm:$0xff] %vm271, %v454
          %487 = vst.msk [vmem:[#allocation3 + $0xc8] sm:$0xff] %vm271, %v455
          %488 = vst.msk [vmem:[#allocation3 + $0xd0] sm:$0xff] %vm271, %v456
          %489 = vst.msk [vmem:[#allocation3 + $0xd8] sm:$0xff] %vm271, %v457
          %490 = vst.msk [vmem:[#allocation3 + $0xe0] sm:$0xff] %vm271, %v458
          %491 = vst.msk [vmem:[#allocation3 + $0xe8] sm:$0xff] %vm271, %v459
          %492 = vst.msk [vmem:[#allocation3 + $0xf0] sm:$0xff] %vm271, %v460
          %493 = vst.msk [vmem:[#allocation3 + $0xf8] sm:$0xff] %vm271, %v461
          %v494 = vld [vmem:[#allocation2 + $0x1] sm:$0xff]
          %v495 = vld [vmem:[#allocation2 + $0x9] sm:$0xff]
          %v496 = vld [vmem:[#allocation2 + $0x19] sm:$0xff]
          %v497 = vld [vmem:[#allocation2 + $0x21] sm:$0xff]
          %v498 = vld [vmem:[#allocation2 + $0x31] sm:$0xff]
          %v499 = vld [vmem:[#allocation2 + $0x39] sm:$0xff]
          %v500 = vld [vmem:[#allocation2 + $0x49] sm:$0xff]
          %v501 = vld [vmem:[#allocation2 + $0x51] sm:$0xff]
          %v502 = vld [vmem:[#allocation2 + $0x61] sm:$0xff]
          %v503 = vld [vmem:[#allocation2 + $0x69] sm:$0xff]
          %v504 = vld [vmem:[#allocation2 + $0x79] sm:$0xff]
          %v505 = vld [vmem:[#allocation2 + $0x81] sm:$0xff]
          %v506 = vld [vmem:[#allocation2 + $0x91] sm:$0xff]
          %v507 = vld [vmem:[#allocation2 + $0x99] sm:$0xff]
          %v508 = vld [vmem:[#allocation2 + $0xa9] sm:$0xff]
          %v509 = vld [vmem:[#allocation2 + $0xb1] sm:$0xff]
          %v510 = vld [vmem:[#allocation2 + $0xc1] sm:$0xff]
          %v511 = vld [vmem:[#allocation2 + $0xc9] sm:$0xff]
          %v512 = vld [vmem:[#allocation2 + $0xd9] sm:$0xff]
          %v513 = vld [vmem:[#allocation2 + $0xe1] sm:$0xff]
          %v514 = vld [vmem:[#allocation2 + $0xf1] sm:$0xff]
          %v515 = vld [vmem:[#allocation2 + $0xf9] sm:$0xff]
          %v516 = vld [vmem:[#allocation2 + $0x109] sm:$0xff]
          %v517 = vld [vmem:[#allocation2 + $0x111] sm:$0xff]
          %v518 = vld [vmem:[#allocation2 + $0x121] sm:$0xff]
          %v519 = vld [vmem:[#allocation2 + $0x129] sm:$0xff]
          %v520 = vld [vmem:[#allocation2 + $0x139] sm:$0xff]
          %v521 = vld [vmem:[#allocation2 + $0x141] sm:$0xff]
          %v522 = vld [vmem:[#allocation2 + $0x151] sm:$0xff]
          %v523 = vld [vmem:[#allocation2 + $0x159] sm:$0xff]
          %v524 = vld [vmem:[#allocation2 + $0x169] sm:$0xff]
          %v525 = vld [vmem:[#allocation2 + $0x171] sm:$0xff]
          %558 = vrot.lane.b32.xlu0 %v494, 4
          %v559 = vpop.permute.xlu0 %558
          %560 = vrot.lane.b32.xlu0 %v495, 4
          %v561 = vpop.permute.xlu0 %560
          %562 = vrot.lane.b32.xlu0 %v496, 4
          %v563 = vpop.permute.xlu0 %562
          %564 = vrot.lane.b32.xlu0 %v497, 4
          %v565 = vpop.permute.xlu0 %564
          %566 = vrot.lane.b32.xlu0 %v498, 4
          %v567 = vpop.permute.xlu0 %566
          %568 = vrot.lane.b32.xlu0 %v499, 4
          %v569 = vpop.permute.xlu0 %568
          %570 = vrot.lane.b32.xlu0 %v500, 4
          %v571 = vpop.permute.xlu0 %570
          %572 = vrot.lane.b32.xlu0 %v501, 4
          %v573 = vpop.permute.xlu0 %572
          %574 = vrot.lane.b32.xlu0 %v502, 4
          %v575 = vpop.permute.xlu0 %574
          %576 = vrot.lane.b32.xlu0 %v503, 4
          %v577 = vpop.permute.xlu0 %576
          %578 = vrot.lane.b32.xlu0 %v504, 4
          %v579 = vpop.permute.xlu0 %578
          %580 = vrot.lane.b32.xlu0 %v505, 4
          %v581 = vpop.permute.xlu0 %580
          %582 = vrot.lane.b32.xlu0 %v506, 4
          %v583 = vpop.permute.xlu0 %582
          %584 = vrot.lane.b32.xlu0 %v507, 4
          %v585 = vpop.permute.xlu0 %584
          %586 = vrot.lane.b32.xlu0 %v508, 4
          %v587 = vpop.permute.xlu0 %586
          %588 = vrot.lane.b32.xlu0 %v509, 4
          %v589 = vpop.permute.xlu0 %588
          %590 = vrot.lane.b32.xlu0 %v510, 4
          %v591 = vpop.permute.xlu0 %590
          %592 = vrot.lane.b32.xlu0 %v511, 4
          %v593 = vpop.permute.xlu0 %592
          %594 = vrot.lane.b32.xlu0 %v512, 4
          %v595 = vpop.permute.xlu0 %594
          %596 = vrot.lane.b32.xlu0 %v513, 4
          %v597 = vpop.permute.xlu0 %596
          %598 = vrot.lane.b32.xlu0 %v514, 4
          %v599 = vpop.permute.xlu0 %598
          %600 = vrot.lane.b32.xlu0 %v515, 4
          %v601 = vpop.permute.xlu0 %600
          %602 = vrot.lane.b32.xlu0 %v516, 4
          %v603 = vpop.permute.xlu0 %602
          %604 = vrot.lane.b32.xlu0 %v517, 4
          %v605 = vpop.permute.xlu0 %604
          %606 = vrot.lane.b32.xlu0 %v518, 4
          %v607 = vpop.permute.xlu0 %606
          %608 = vrot.lane.b32.xlu0 %v519, 4
          %v609 = vpop.permute.xlu0 %608
          %610 = vrot.lane.b32.xlu0 %v520, 4
          %v611 = vpop.permute.xlu0 %610
          %612 = vrot.lane.b32.xlu0 %v521, 4
          %v613 = vpop.permute.xlu0 %612
          %614 = vrot.lane.b32.xlu0 %v522, 4
          %v615 = vpop.permute.xlu0 %614
          %616 = vrot.lane.b32.xlu0 %v523, 4
          %v617 = vpop.permute.xlu0 %616
          %618 = vrot.lane.b32.xlu0 %v524, 4
          %v619 = vpop.permute.xlu0 %618
          %620 = vrot.lane.b32.xlu0 %v525, 4
          %v621 = vpop.permute.xlu0 %620
          %vm654 = vcmask 64544
          %655 = vst.msk [vmem:[#allocation3] sm:$0xff] %vm654, %v559
          %656 = vst.msk [vmem:[#allocation3 + $0x8] sm:$0xff] %vm654, %v561
          %657 = vst.msk [vmem:[#allocation3 + $0x10] sm:$0xff] %vm654, %v563
          %658 = vst.msk [vmem:[#allocation3 + $0x18] sm:$0xff] %vm654, %v565
          %659 = vst.msk [vmem:[#allocation3 + $0x20] sm:$0xff] %vm654, %v567
          %660 = vst.msk [vmem:[#allocation3 + $0x28] sm:$0xff] %vm654, %v569
          %661 = vst.msk [vmem:[#allocation3 + $0x30] sm:$0xff] %vm654, %v571
          %662 = vst.msk [vmem:[#allocation3 + $0x38] sm:$0xff] %vm654, %v573
          %663 = vst.msk [vmem:[#allocation3 + $0x40] sm:$0xff] %vm654, %v575
          %664 = vst.msk [vmem:[#allocation3 + $0x48] sm:$0xff] %vm654, %v577
          %665 = vst.msk [vmem:[#allocation3 + $0x50] sm:$0xff] %vm654, %v579
          %666 = vst.msk [vmem:[#allocation3 + $0x58] sm:$0xff] %vm654, %v581
          %667 = vst.msk [vmem:[#allocation3 + $0x60] sm:$0xff] %vm654, %v583
          %668 = vst.msk [vmem:[#allocation3 + $0x68] sm:$0xff] %vm654, %v585
          %669 = vst.msk [vmem:[#allocation3 + $0x70] sm:$0xff] %vm654, %v587
          %670 = vst.msk [vmem:[#allocation3 + $0x78] sm:$0xff] %vm654, %v589
          %671 = vst.msk [vmem:[#allocation3 + $0x80] sm:$0xff] %vm654, %v591
          %672 = vst.msk [vmem:[#allocation3 + $0x88] sm:$0xff] %vm654, %v593
          %673 = vst.msk [vmem:[#allocation3 + $0x90] sm:$0xff] %vm654, %v595
          %674 = vst.msk [vmem:[#allocation3 + $0x98] sm:$0xff] %vm654, %v597
          %675 = vst.msk [vmem:[#allocation3 + $0xa0] sm:$0xff] %vm654, %v599
          %676 = vst.msk [vmem:[#allocation3 + $0xa8] sm:$0xff] %vm654, %v601
          %677 = vst.msk [vmem:[#allocation3 + $0xb0] sm:$0xff] %vm654, %v603
          %678 = vst.msk [vmem:[#allocation3 + $0xb8] sm:$0xff] %vm654, %v605
          %679 = vst.msk [vmem:[#allocation3 + $0xc0] sm:$0xff] %vm654, %v607
          %680 = vst.msk [vmem:[#allocation3 + $0xc8] sm:$0xff] %vm654, %v609
          %681 = vst.msk [vmem:[#allocation3 + $0xd0] sm:$0xff] %vm654, %v611
          %682 = vst.msk [vmem:[#allocation3 + $0xd8] sm:$0xff] %vm654, %v613
          %683 = vst.msk [vmem:[#allocation3 + $0xe0] sm:$0xff] %vm654, %v615
          %684 = vst.msk [vmem:[#allocation3 + $0xe8] sm:$0xff] %vm654, %v617
          %685 = vst.msk [vmem:[#allocation3 + $0xf0] sm:$0xff] %vm654, %v619
          %686 = vst.msk [vmem:[#allocation3 + $0xf8] sm:$0xff] %vm654, %v621
          %v687 = vld [vmem:[#allocation2 + $0x2] sm:$0xff]
          %v688 = vld [vmem:[#allocation2 + $0xa] sm:$0xff]
          %v689 = vld [vmem:[#allocation2 + $0x1a] sm:$0xff]
          %v690 = vld [vmem:[#allocation2 + $0x22] sm:$0xff]
          %v691 = vld [vmem:[#allocation2 + $0x32] sm:$0xff]
          %v692 = vld [vmem:[#allocation2 + $0x3a] sm:$0xff]
          %v693 = vld [vmem:[#allocation2 + $0x4a] sm:$0xff]
          %v694 = vld [vmem:[#allocation2 + $0x52] sm:$0xff]
          %v695 = vld [vmem:[#allocation2 + $0x62] sm:$0xff]
          %v696 = vld [vmem:[#allocation2 + $0x6a] sm:$0xff]
          %v697 = vld [vmem:[#allocation2 + $0x7a] sm:$0xff]
          %v698 = vld [vmem:[#allocation2 + $0x82] sm:$0xff]
          %v699 = vld [vmem:[#allocation2 + $0x92] sm:$0xff]
          %v700 = vld [vmem:[#allocation2 + $0x9a] sm:$0xff]
          %v701 = vld [vmem:[#allocation2 + $0xaa] sm:$0xff]
          %v702 = vld [vmem:[#allocation2 + $0xb2] sm:$0xff]
          %v703 = vld [vmem:[#allocation2 + $0xc2] sm:$0xff]
          %v704 = vld [vmem:[#allocation2 + $0xca] sm:$0xff]
          %v705 = vld [vmem:[#allocation2 + $0xda] sm:$0xff]
          %v706 = vld [vmem:[#allocation2 + $0xe2] sm:$0xff]
          %v707 = vld [vmem:[#allocation2 + $0xf2] sm:$0xff]
          %v708 = vld [vmem:[#allocation2 + $0xfa] sm:$0xff]
          %v709 = vld [vmem:[#allocation2 + $0x10a] sm:$0xff]
          %v710 = vld [vmem:[#allocation2 + $0x112] sm:$0xff]
          %v711 = vld [vmem:[#allocation2 + $0x122] sm:$0xff]
          %v712 = vld [vmem:[#allocation2 + $0x12a] sm:$0xff]
          %v713 = vld [vmem:[#allocation2 + $0x13a] sm:$0xff]
          %v714 = vld [vmem:[#allocation2 + $0x142] sm:$0xff]
          %v715 = vld [vmem:[#allocation2 + $0x152] sm:$0xff]
          %v716 = vld [vmem:[#allocation2 + $0x15a] sm:$0xff]
          %v717 = vld [vmem:[#allocation2 + $0x16a] sm:$0xff]
          %v718 = vld [vmem:[#allocation2 + $0x172] sm:$0xff]
          %751 = vrot.lane.b32.xlu0 %v687, 8
          %v752 = vpop.permute.xlu0 %751
          %753 = vrot.lane.b32.xlu0 %v688, 8
          %v754 = vpop.permute.xlu0 %753
          %755 = vrot.lane.b32.xlu0 %v689, 8
          %v756 = vpop.permute.xlu0 %755
          %757 = vrot.lane.b32.xlu0 %v690, 8
          %v758 = vpop.permute.xlu0 %757
          %759 = vrot.lane.b32.xlu0 %v691, 8
          %v760 = vpop.permute.xlu0 %759
          %761 = vrot.lane.b32.xlu0 %v692, 8
          %v762 = vpop.permute.xlu0 %761
          %763 = vrot.lane.b32.xlu0 %v693, 8
          %v764 = vpop.permute.xlu0 %763
          %765 = vrot.lane.b32.xlu0 %v694, 8
          %v766 = vpop.permute.xlu0 %765
          %767 = vrot.lane.b32.xlu0 %v695, 8
          %v768 = vpop.permute.xlu0 %767
          %769 = vrot.lane.b32.xlu0 %v696, 8
          %v770 = vpop.permute.xlu0 %769
          %771 = vrot.lane.b32.xlu0 %v697, 8
          %v772 = vpop.permute.xlu0 %771
          %773 = vrot.lane.b32.xlu0 %v698, 8
          %v774 = vpop.permute.xlu0 %773
          %775 = vrot.lane.b32.xlu0 %v699, 8
          %v776 = vpop.permute.xlu0 %775
          %777 = vrot.lane.b32.xlu0 %v700, 8
          %v778 = vpop.permute.xlu0 %777
          %779 = vrot.lane.b32.xlu0 %v701, 8
          %v780 = vpop.permute.xlu0 %779
          %781 = vrot.lane.b32.xlu0 %v702, 8
          %v782 = vpop.permute.xlu0 %781
          %783 = vrot.lane.b32.xlu0 %v703, 8
          %v784 = vpop.permute.xlu0 %783
          %785 = vrot.lane.b32.xlu0 %v704, 8
          %v786 = vpop.permute.xlu0 %785
          %787 = vrot.lane.b32.xlu0 %v705, 8
          %v788 = vpop.permute.xlu0 %787
          %789 = vrot.lane.b32.xlu0 %v706, 8
          %v790 = vpop.permute.xlu0 %789
          %791 = vrot.lane.b32.xlu0 %v707, 8
          %v792 = vpop.permute.xlu0 %791
          %793 = vrot.lane.b32.xlu0 %v708, 8
          %v794 = vpop.permute.xlu0 %793
          %795 = vrot.lane.b32.xlu0 %v709, 8
          %v796 = vpop.permute.xlu0 %795
          %797 = vrot.lane.b32.xlu0 %v710, 8
          %v798 = vpop.permute.xlu0 %797
          %799 = vrot.lane.b32.xlu0 %v711, 8
          %v800 = vpop.permute.xlu0 %799
          %801 = vrot.lane.b32.xlu0 %v712, 8
          %v802 = vpop.permute.xlu0 %801
          %803 = vrot.lane.b32.xlu0 %v713, 8
          %v804 = vpop.permute.xlu0 %803
          %805 = vrot.lane.b32.xlu0 %v714, 8
          %v806 = vpop.permute.xlu0 %805
          %807 = vrot.lane.b32.xlu0 %v715, 8
          %v808 = vpop.permute.xlu0 %807
          %809 = vrot.lane.b32.xlu0 %v716, 8
          %v810 = vpop.permute.xlu0 %809
          %811 = vrot.lane.b32.xlu0 %v717, 8
          %v812 = vpop.permute.xlu0 %811
          %813 = vrot.lane.b32.xlu0 %v718, 8
          %v814 = vpop.permute.xlu0 %813
          %vm847 = vcmask 97344
          %848 = vst.msk [vmem:[#allocation3] sm:$0xff] %vm847, %v752
          %849 = vst.msk [vmem:[#allocation3 + $0x8] sm:$0xff] %vm847, %v754
          %850 = vst.msk [vmem:[#allocation3 + $0x10] sm:$0xff] %vm847, %v756
          %851 = vst.msk [vmem:[#allocation3 + $0x18] sm:$0xff] %vm847, %v758
          %852 = vst.msk [vmem:[#allocation3 + $0x20] sm:$0xff] %vm847, %v760
          %853 = vst.msk [vmem:[#allocation3 + $0x28] sm:$0xff] %vm847, %v762
          %854 = vst.msk [vmem:[#allocation3 + $0x30] sm:$0xff] %vm847, %v764
          %855 = vst.msk [vmem:[#allocation3 + $0x38] sm:$0xff] %vm847, %v766
          %856 = vst.msk [vmem:[#allocation3 + $0x40] sm:$0xff] %vm847, %v768
          %857 = vst.msk [vmem:[#allocation3 + $0x48] sm:$0xff] %vm847, %v770
          %858 = vst.msk [vmem:[#allocation3 + $0x50] sm:$0xff] %vm847, %v772
          %859 = vst.msk [vmem:[#allocation3 + $0x58] sm:$0xff] %vm847, %v774
          %860 = vst.msk [vmem:[#allocation3 + $0x60] sm:$0xff] %vm847, %v776
          %861 = vst.msk [vmem:[#allocation3 + $0x68] sm:$0xff] %vm847, %v778
          %862 = vst.msk [vmem:[#allocation3 + $0x70] sm:$0xff] %vm847, %v780
          %863 = vst.msk [vmem:[#allocation3 + $0x78] sm:$0xff] %vm847, %v782
          %864 = vst.msk [vmem:[#allocation3 + $0x80] sm:$0xff] %vm847, %v784
          %865 = vst.msk [vmem:[#allocation3 + $0x88] sm:$0xff] %vm847, %v786
          %866 = vst.msk [vmem:[#allocation3 + $0x90] sm:$0xff] %vm847, %v788
          %867 = vst.msk [vmem:[#allocation3 + $0x98] sm:$0xff] %vm847, %v790
          %868 = vst.msk [vmem:[#allocation3 + $0xa0] sm:$0xff] %vm847, %v792
          %869 = vst.msk [vmem:[#allocation3 + $0xa8] sm:$0xff] %vm847, %v794
          %870 = vst.msk [vmem:[#allocation3 + $0xb0] sm:$0xff] %vm847, %v796
          %871 = vst.msk [vmem:[#allocation3 + $0xb8] sm:$0xff] %vm847, %v798
          %872 = vst.msk [vmem:[#allocation3 + $0xc0] sm:$0xff] %vm847, %v800
          %873 = vst.msk [vmem:[#allocation3 + $0xc8] sm:$0xff] %vm847, %v802
          %874 = vst.msk [vmem:[#allocation3 + $0xd0] sm:$0xff] %vm847, %v804
          %875 = vst.msk [vmem:[#allocation3 + $0xd8] sm:$0xff] %vm847, %v806
          %876 = vst.msk [vmem:[#allocation3 + $0xe0] sm:$0xff] %vm847, %v808
          %877 = vst.msk [vmem:[#allocation3 + $0xe8] sm:$0xff] %vm847, %v810
          %878 = vst.msk [vmem:[#allocation3 + $0xf0] sm:$0xff] %vm847, %v812
          %879 = vst.msk [vmem:[#allocation3 + $0xf8] sm:$0xff] %vm847, %v814
          %v880 = vld [vmem:[%s397] sm:$0xff]
          %v881 = vld [vmem:[%s397 + $0x8] sm:$0xff]
          %v882 = vld [vmem:[%s397 + $0x18] sm:$0xff]
          %v883 = vld [vmem:[%s397 + $0x20] sm:$0xff]
          %v884 = vld [vmem:[%s397 + $0x30] sm:$0xff]
          %v885 = vld [vmem:[%s397 + $0x38] sm:$0xff]
          %v886 = vld [vmem:[%s397 + $0x48] sm:$0xff]
          %v887 = vld [vmem:[%s397 + $0x50] sm:$0xff]
          %v888 = vld [vmem:[%s397 + $0x60] sm:$0xff]
          %v889 = vld [vmem:[%s397 + $0x68] sm:$0xff]
          %v890 = vld [vmem:[%s397 + $0x78] sm:$0xff]
          %v891 = vld [vmem:[%s397 + $0x80] sm:$0xff]
          %v892 = vld [vmem:[%s397 + $0x90] sm:$0xff]
          %v893 = vld [vmem:[%s397 + $0x98] sm:$0xff]
          %v894 = vld [vmem:[%s397 + $0xa8] sm:$0xff]
          %v895 = vld [vmem:[%s397 + $0xb0] sm:$0xff]
          %v896 = vld [vmem:[%s397 + $0xc0] sm:$0xff]
          %v897 = vld [vmem:[%s397 + $0xc8] sm:$0xff]
          %v898 = vld [vmem:[%s397 + $0xd8] sm:$0xff]
          %v899 = vld [vmem:[%s397 + $0xe0] sm:$0xff]
          %v900 = vld [vmem:[%s397 + $0xf0] sm:$0xff]
          %v901 = vld [vmem:[%s397 + $0xf8] sm:$0xff]
          %v902 = vld [vmem:[%s397 + $0x108] sm:$0xff]
          %v903 = vld [vmem:[%s397 + $0x110] sm:$0xff]
          %v904 = vld [vmem:[%s397 + $0x120] sm:$0xff]
          %v905 = vld [vmem:[%s397 + $0x128] sm:$0xff]
          %v906 = vld [vmem:[%s397 + $0x138] sm:$0xff]
          %v907 = vld [vmem:[%s397 + $0x140] sm:$0xff]
          %v908 = vld [vmem:[%s397 + $0x150] sm:$0xff]
          %v909 = vld [vmem:[%s397 + $0x158] sm:$0xff]
          %v910 = vld [vmem:[%s397 + $0x168] sm:$0xff]
          %v911 = vld [vmem:[%s397 + $0x170] sm:$0xff]
          %944 = vrot.lane.b32.xlu0 %v880, 12
          %v945 = vpop.permute.xlu0 %944
          %946 = vrot.lane.b32.xlu0 %v881, 12
          %v947 = vpop.permute.xlu0 %946
          %948 = vrot.lane.b32.xlu0 %v882, 12
          %v949 = vpop.permute.xlu0 %948
          %950 = vrot.lane.b32.xlu0 %v883, 12
          %v951 = vpop.permute.xlu0 %950
          %952 = vrot.lane.b32.xlu0 %v884, 12
          %v953 = vpop.permute.xlu0 %952
          %954 = vrot.lane.b32.xlu0 %v885, 12
          %v955 = vpop.permute.xlu0 %954
          %956 = vrot.lane.b32.xlu0 %v886, 12
          %v957 = vpop.permute.xlu0 %956
          %958 = vrot.lane.b32.xlu0 %v887, 12
          %v959 = vpop.permute.xlu0 %958
          %960 = vrot.lane.b32.xlu0 %v888, 12
          %v961 = vpop.permute.xlu0 %960
          %962 = vrot.lane.b32.xlu0 %v889, 12
          %v963 = vpop.permute.xlu0 %962
          %964 = vrot.lane.b32.xlu0 %v890, 12
          %v965 = vpop.permute.xlu0 %964
          %966 = vrot.lane.b32.xlu0 %v891, 12
          %v967 = vpop.permute.xlu0 %966
          %968 = vrot.lane.b32.xlu0 %v892, 12
          %v969 = vpop.permute.xlu0 %968
          %970 = vrot.lane.b32.xlu0 %v893, 12
          %v971 = vpop.permute.xlu0 %970
          %972 = vrot.lane.b32.xlu0 %v894, 12
          %v973 = vpop.permute.xlu0 %972
          %974 = vrot.lane.b32.xlu0 %v895, 12
          %v975 = vpop.permute.xlu0 %974
          %976 = vrot.lane.b32.xlu0 %v896, 12
          %v977 = vpop.permute.xlu0 %976
          %978 = vrot.lane.b32.xlu0 %v897, 12
          %v979 = vpop.permute.xlu0 %978
          %980 = vrot.lane.b32.xlu0 %v898, 12
          %v981 = vpop.permute.xlu0 %980
          %982 = vrot.lane.b32.xlu0 %v899, 12
          %v983 = vpop.permute.xlu0 %982
          %984 = vrot.lane.b32.xlu0 %v900, 12
          %v985 = vpop.permute.xlu0 %984
          %986 = vrot.lane.b32.xlu0 %v901, 12
          %v987 = vpop.permute.xlu0 %986
          %988 = vrot.lane.b32.xlu0 %v902, 12
          %v989 = vpop.permute.xlu0 %988
          %990 = vrot.lane.b32.xlu0 %v903, 12
          %v991 = vpop.permute.xlu0 %990
          %992 = vrot.lane.b32.xlu0 %v904, 12
          %v993 = vpop.permute.xlu0 %992
          %994 = vrot.lane.b32.xlu0 %v905, 12
          %v995 = vpop.permute.xlu0 %994
          %996 = vrot.lane.b32.xlu0 %v906, 12
          %v997 = vpop.permute.xlu0 %996
          %998 = vrot.lane.b32.xlu0 %v907, 12
          %v999 = vpop.permute.xlu0 %998
          %1000 = vrot.lane.b32.xlu0 %v908, 12
          %v1001 = vpop.permute.xlu0 %1000
          %1002 = vrot.lane.b32.xlu0 %v909, 12
          %v1003 = vpop.permute.xlu0 %1002
          %1004 = vrot.lane.b32.xlu0 %v910, 12
          %v1005 = vpop.permute.xlu0 %1004
          %1006 = vrot.lane.b32.xlu0 %v911, 12
          %v1007 = vpop.permute.xlu0 %1006
          %vm1040 = vcmask 130144
          %1041 = vst.msk [vmem:[#allocation3] sm:$0xff] %vm1040, %v945
          %1042 = vst.msk [vmem:[#allocation3 + $0x8] sm:$0xff] %vm1040, %v947
          %1043 = vst.msk [vmem:[#allocation3 + $0x10] sm:$0xff] %vm1040, %v949
          %1044 = vst.msk [vmem:[#allocation3 + $0x18] sm:$0xff] %vm1040, %v951
          %1045 = vst.msk [vmem:[#allocation3 + $0x20] sm:$0xff] %vm1040, %v953
          %1046 = vst.msk [vmem:[#allocation3 + $0x28] sm:$0xff] %vm1040, %v955
          %1047 = vst.msk [vmem:[#allocation3 + $0x30] sm:$0xff] %vm1040, %v957
          %1048 = vst.msk [vmem:[#allocation3 + $0x38] sm:$0xff] %vm1040, %v959
          %1049 = vst.msk [vmem:[#allocation3 + $0x40] sm:$0xff] %vm1040, %v961
          %1050 = vst.msk [vmem:[#allocation3 + $0x48] sm:$0xff] %vm1040, %v963
          %1051 = vst.msk [vmem:[#allocation3 + $0x50] sm:$0xff] %vm1040, %v965
          %1052 = vst.msk [vmem:[#allocation3 + $0x58] sm:$0xff] %vm1040, %v967
          %1053 = vst.msk [vmem:[#allocation3 + $0x60] sm:$0xff] %vm1040, %v969
          %1054 = vst.msk [vmem:[#allocation3 + $0x68] sm:$0xff] %vm1040, %v971
          %1055 = vst.msk [vmem:[#allocation3 + $0x70] sm:$0xff] %vm1040, %v973
          %1056 = vst.msk [vmem:[#allocation3 + $0x78] sm:$0xff] %vm1040, %v975
          %1057 = vst.msk [vmem:[#allocation3 + $0x80] sm:$0xff] %vm1040, %v977
          %1058 = vst.msk [vmem:[#allocation3 + $0x88] sm:$0xff] %vm1040, %v979
          %1059 = vst.msk [vmem:[#allocation3 + $0x90] sm:$0xff] %vm1040, %v981
          %1060 = vst.msk [vmem:[#allocation3 + $0x98] sm:$0xff] %vm1040, %v983
          %1061 = vst.msk [vmem:[#allocation3 + $0xa0] sm:$0xff] %vm1040, %v985
          %1062 = vst.msk [vmem:[#allocation3 + $0xa8] sm:$0xff] %vm1040, %v987
          %1063 = vst.msk [vmem:[#allocation3 + $0xb0] sm:$0xff] %vm1040, %v989
          %1064 = vst.msk [vmem:[#allocation3 + $0xb8] sm:$0xff] %vm1040, %v991
          %1065 = vst.msk [vmem:[#allocation3 + $0xc0] sm:$0xff] %vm1040, %v993
          %1066 = vst.msk [vmem:[#allocation3 + $0xc8] sm:$0xff] %vm1040, %v995
          %1067 = vst.msk [vmem:[#allocation3 + $0xd0] sm:$0xff] %vm1040, %v997
          %1068 = vst.msk [vmem:[#allocation3 + $0xd8] sm:$0xff] %vm1040, %v999
          %1069 = vst.msk [vmem:[#allocation3 + $0xe0] sm:$0xff] %vm1040, %v1001
          %1070 = vst.msk [vmem:[#allocation3 + $0xe8] sm:$0xff] %vm1040, %v1003
          %1071 = vst.msk [vmem:[#allocation3 + $0xf0] sm:$0xff] %vm1040, %v1005
          %1072 = vst.msk [vmem:[#allocation3 + $0xf8] sm:$0xff] %vm1040, %v1007
          %v1073 = vld [vmem:[%s397 + $0x1] sm:$0xff]
          %v1074 = vld [vmem:[%s397 + $0x9] sm:$0xff]
          %v1075 = vld [vmem:[%s397 + $0x19] sm:$0xff]
          %v1076 = vld [vmem:[%s397 + $0x21] sm:$0xff]
          %v1077 = vld [vmem:[%s397 + $0x31] sm:$0xff]
          %v1078 = vld [vmem:[%s397 + $0x39] sm:$0xff]
          %v1079 = vld [vmem:[%s397 + $0x49] sm:$0xff]
          %v1080 = vld [vmem:[%s397 + $0x51] sm:$0xff]
          %v1081 = vld [vmem:[%s397 + $0x61] sm:$0xff]
          %v1082 = vld [vmem:[%s397 + $0x69] sm:$0xff]
          %v1083 = vld [vmem:[%s397 + $0x79] sm:$0xff]
          %v1084 = vld [vmem:[%s397 + $0x81] sm:$0xff]
          %v1085 = vld [vmem:[%s397 + $0x91] sm:$0xff]
          %v1086 = vld [vmem:[%s397 + $0x99] sm:$0xff]
          %v1087 = vld [vmem:[%s397 + $0xa9] sm:$0xff]
          %v1088 = vld [vmem:[%s397 + $0xb1] sm:$0xff]
          %v1089 = vld [vmem:[%s397 + $0xc1] sm:$0xff]
          %v1090 = vld [vmem:[%s397 + $0xc9] sm:$0xff]
          %v1091 = vld [vmem:[%s397 + $0xd9] sm:$0xff]
          %v1092 = vld [vmem:[%s397 + $0xe1] sm:$0xff]
          %v1093 = vld [vmem:[%s397 + $0xf1] sm:$0xff]
          %v1094 = vld [vmem:[%s397 + $0xf9] sm:$0xff]
          %v1095 = vld [vmem:[%s397 + $0x109] sm:$0xff]
          %v1096 = vld [vmem:[%s397 + $0x111] sm:$0xff]
          %v1097 = vld [vmem:[%s397 + $0x121] sm:$0xff]
          %v1098 = vld [vmem:[%s397 + $0x129] sm:$0xff]
          %v1099 = vld [vmem:[%s397 + $0x139] sm:$0xff]
          %v1100 = vld [vmem:[%s397 + $0x141] sm:$0xff]
          %v1101 = vld [vmem:[%s397 + $0x151] sm:$0xff]
          %v1102 = vld [vmem:[%s397 + $0x159] sm:$0xff]
          %v1103 = vld [vmem:[%s397 + $0x169] sm:$0xff]
          %v1104 = vld [vmem:[%s397 + $0x171] sm:$0xff]
          %1137 = vrot.lane.b32.xlu0 %v1073, 16
          %v1138 = vpop.permute.xlu0 %1137
          %1139 = vrot.lane.b32.xlu0 %v1074, 16
          %v1140 = vpop.permute.xlu0 %1139
          %1141 = vrot.lane.b32.xlu0 %v1075, 16
          %v1142 = vpop.permute.xlu0 %1141
          %1143 = vrot.lane.b32.xlu0 %v1076, 16
          %v1144 = vpop.permute.xlu0 %1143
          %1145 = vrot.lane.b32.xlu0 %v1077, 16
          %v1146 = vpop.permute.xlu0 %1145
          %1147 = vrot.lane.b32.xlu0 %v1078, 16
          %v1148 = vpop.permute.xlu0 %1147
          %1149 = vrot.lane.b32.xlu0 %v1079, 16
          %v1150 = vpop.permute.xlu0 %1149
          %1151 = vrot.lane.b32.xlu0 %v1080, 16
          %v1152 = vpop.permute.xlu0 %1151
          %1153 = vrot.lane.b32.xlu0 %v1081, 16
          %v1154 = vpop.permute.xlu0 %1153
          %1155 = vrot.lane.b32.xlu0 %v1082, 16
          %v1156 = vpop.permute.xlu0 %1155
          %1157 = vrot.lane.b32.xlu0 %v1083, 16
          %v1158 = vpop.permute.xlu0 %1157
          %1159 = vrot.lane.b32.xlu0 %v1084, 16
          %v1160 = vpop.permute.xlu0 %1159
          %1161 = vrot.lane.b32.xlu0 %v1085, 16
          %v1162 = vpop.permute.xlu0 %1161
          %1163 = vrot.lane.b32.xlu0 %v1086, 16
          %v1164 = vpop.permute.xlu0 %1163
          %1165 = vrot.lane.b32.xlu0 %v1087, 16
          %v1166 = vpop.permute.xlu0 %1165
          %1167 = vrot.lane.b32.xlu0 %v1088, 16
          %v1168 = vpop.permute.xlu0 %1167
          %1169 = vrot.lane.b32.xlu0 %v1089, 16
          %v1170 = vpop.permute.xlu0 %1169
          %1171 = vrot.lane.b32.xlu0 %v1090, 16
          %v1172 = vpop.permute.xlu0 %1171
          %1173 = vrot.lane.b32.xlu0 %v1091, 16
          %v1174 = vpop.permute.xlu0 %1173
          %1175 = vrot.lane.b32.xlu0 %v1092, 16
          %v1176 = vpop.permute.xlu0 %1175
          %1177 = vrot.lane.b32.xlu0 %v1093, 16
          %v1178 = vpop.permute.xlu0 %1177
          %1179 = vrot.lane.b32.xlu0 %v1094, 16
          %v1180 = vpop.permute.xlu0 %1179
          %1181 = vrot.lane.b32.xlu0 %v1095, 16
          %v1182 = vpop.permute.xlu0 %1181
          %1183 = vrot.lane.b32.xlu0 %v1096, 16
          %v1184 = vpop.permute.xlu0 %1183
          %1185 = vrot.lane.b32.xlu0 %v1097, 16
          %v1186 = vpop.permute.xlu0 %1185
          %1187 = vrot.lane.b32.xlu0 %v1098, 16
          %v1188 = vpop.permute.xlu0 %1187
          %1189 = vrot.lane.b32.xlu0 %v1099, 16
          %v1190 = vpop.permute.xlu0 %1189
          %1191 = vrot.lane.b32.xlu0 %v1100, 16
          %v1192 = vpop.permute.xlu0 %1191
          %1193 = vrot.lane.b32.xlu0 %v1101, 16
          %v1194 = vpop.permute.xlu0 %1193
          %1195 = vrot.lane.b32.xlu0 %v1102, 16
          %v1196 = vpop.permute.xlu0 %1195
          %1197 = vrot.lane.b32.xlu0 %v1103, 16
          %v1198 = vpop.permute.xlu0 %1197
          %1199 = vrot.lane.b32.xlu0 %v1104, 16
          %v1200 = vpop.permute.xlu0 %1199
          %vm1233 = vcmask 162944
          %1234 = vst.msk [vmem:[#allocation3] sm:$0xff] %vm1233, %v1138
          %1235 = vst.msk [vmem:[#allocation3 + $0x8] sm:$0xff] %vm1233, %v1140
          %1236 = vst.msk [vmem:[#allocation3 + $0x10] sm:$0xff] %vm1233, %v1142
          %1237 = vst.msk [vmem:[#allocation3 + $0x18] sm:$0xff] %vm1233, %v1144
          %1238 = vst.msk [vmem:[#allocation3 + $0x20] sm:$0xff] %vm1233, %v1146
          %1239 = vst.msk [vmem:[#allocation3 + $0x28] sm:$0xff] %vm1233, %v1148
          %1240 = vst.msk [vmem:[#allocation3 + $0x30] sm:$0xff] %vm1233, %v1150
          %1241 = vst.msk [vmem:[#allocation3 + $0x38] sm:$0xff] %vm1233, %v1152
          %1242 = vst.msk [vmem:[#allocation3 + $0x40] sm:$0xff] %vm1233, %v1154
          %1243 = vst.msk [vmem:[#allocation3 + $0x48] sm:$0xff] %vm1233, %v1156
          %1244 = vst.msk [vmem:[#allocation3 + $0x50] sm:$0xff] %vm1233, %v1158
          %1245 = vst.msk [vmem:[#allocation3 + $0x58] sm:$0xff] %vm1233, %v1160
          %1246 = vst.msk [vmem:[#allocation3 + $0x60] sm:$0xff] %vm1233, %v1162
          %1247 = vst.msk [vmem:[#allocation3 + $0x68] sm:$0xff] %vm1233, %v1164
          %1248 = vst.msk [vmem:[#allocation3 + $0x70] sm:$0xff] %vm1233, %v1166
          %1249 = vst.msk [vmem:[#allocation3 + $0x78] sm:$0xff] %vm1233, %v1168
          %1250 = vst.msk [vmem:[#allocation3 + $0x80] sm:$0xff] %vm1233, %v1170
          %1251 = vst.msk [vmem:[#allocation3 + $0x88] sm:$0xff] %vm1233, %v1172
          %1252 = vst.msk [vmem:[#allocation3 + $0x90] sm:$0xff] %vm1233, %v1174
          %1253 = vst.msk [vmem:[#allocation3 + $0x98] sm:$0xff] %vm1233, %v1176
          %1254 = vst.msk [vmem:[#allocation3 + $0xa0] sm:$0xff] %vm1233, %v1178
          %1255 = vst.msk [vmem:[#allocation3 + $0xa8] sm:$0xff] %vm1233, %v1180
          %1256 = vst.msk [vmem:[#allocation3 + $0xb0] sm:$0xff] %vm1233, %v1182
          %1257 = vst.msk [vmem:[#allocation3 + $0xb8] sm:$0xff] %vm1233, %v1184
          %1258 = vst.msk [vmem:[#allocation3 + $0xc0] sm:$0xff] %vm1233, %v1186
          %1259 = vst.msk [vmem:[#allocation3 + $0xc8] sm:$0xff] %vm1233, %v1188
          %1260 = vst.msk [vmem:[#allocation3 + $0xd0] sm:$0xff] %vm1233, %v1190
          %1261 = vst.msk [vmem:[#allocation3 + $0xd8] sm:$0xff] %vm1233, %v1192
          %1262 = vst.msk [vmem:[#allocation3 + $0xe0] sm:$0xff] %vm1233, %v1194
          %1263 = vst.msk [vmem:[#allocation3 + $0xe8] sm:$0xff] %vm1233, %v1196
          %1264 = vst.msk [vmem:[#allocation3 + $0xf0] sm:$0xff] %vm1233, %v1198
          %1265 = vst.msk [vmem:[#allocation3 + $0xf8] sm:$0xff] %vm1233, %v1200
          %v1266 = vld [vmem:[%s397 + $0x2] sm:$0xff]
          %v1267 = vld [vmem:[%s397 + $0xa] sm:$0xff]
          %v1268 = vld [vmem:[%s397 + $0x1a] sm:$0xff]
          %v1269 = vld [vmem:[%s397 + $0x22] sm:$0xff]
          %v1270 = vld [vmem:[%s397 + $0x32] sm:$0xff]
          %v1271 = vld [vmem:[%s397 + $0x3a] sm:$0xff]
          %v1272 = vld [vmem:[%s397 + $0x4a] sm:$0xff]
          %v1273 = vld [vmem:[%s397 + $0x52] sm:$0xff]
          %v1274 = vld [vmem:[%s397 + $0x62] sm:$0xff]
          %v1275 = vld [vmem:[%s397 + $0x6a] sm:$0xff]
          %v1276 = vld [vmem:[%s397 + $0x7a] sm:$0xff]
          %v1277 = vld [vmem:[%s397 + $0x82] sm:$0xff]
          %v1278 = vld [vmem:[%s397 + $0x92] sm:$0xff]
          %v1279 = vld [vmem:[%s397 + $0x9a] sm:$0xff]
          %v1280 = vld [vmem:[%s397 + $0xaa] sm:$0xff]
          %v1281 = vld [vmem:[%s397 + $0xb2] sm:$0xff]
          %v1282 = vld [vmem:[%s397 + $0xc2] sm:$0xff]
          %v1283 = vld [vmem:[%s397 + $0xca] sm:$0xff]
          %v1284 = vld [vmem:[%s397 + $0xda] sm:$0xff]
          %v1285 = vld [vmem:[%s397 + $0xe2] sm:$0xff]
          %v1286 = vld [vmem:[%s397 + $0xf2] sm:$0xff]
          %v1287 = vld [vmem:[%s397 + $0xfa] sm:$0xff]
          %v1288 = vld [vmem:[%s397 + $0x10a] sm:$0xff]
          %v1289 = vld [vmem:[%s397 + $0x112] sm:$0xff]
          %v1290 = vld [vmem:[%s397 + $0x122] sm:$0xff]
          %v1291 = vld [vmem:[%s397 + $0x12a] sm:$0xff]
          %v1292 = vld [vmem:[%s397 + $0x13a] sm:$0xff]
          %v1293 = vld [vmem:[%s397 + $0x142] sm:$0xff]
          %v1294 = vld [vmem:[%s397 + $0x152] sm:$0xff]
          %v1295 = vld [vmem:[%s397 + $0x15a] sm:$0xff]
          %v1296 = vld [vmem:[%s397 + $0x16a] sm:$0xff]
          %v1297 = vld [vmem:[%s397 + $0x172] sm:$0xff]
          %1330 = vrot.lane.b32.xlu0 %v1266, 20
          %v1331 = vpop.permute.xlu0 %1330
          %1332 = vrot.lane.b32.xlu0 %v1267, 20
          %v1333 = vpop.permute.xlu0 %1332
          %1334 = vrot.lane.b32.xlu0 %v1268, 20
          %v1335 = vpop.permute.xlu0 %1334
          %1336 = vrot.lane.b32.xlu0 %v1269, 20
          %v1337 = vpop.permute.xlu0 %1336
          %1338 = vrot.lane.b32.xlu0 %v1270, 20
          %v1339 = vpop.permute.xlu0 %1338
          %1340 = vrot.lane.b32.xlu0 %v1271, 20
          %v1341 = vpop.permute.xlu0 %1340
          %1342 = vrot.lane.b32.xlu0 %v1272, 20
          %v1343 = vpop.permute.xlu0 %1342
          %1344 = vrot.lane.b32.xlu0 %v1273, 20
          %v1345 = vpop.permute.xlu0 %1344
          %1346 = vrot.lane.b32.xlu0 %v1274, 20
          %v1347 = vpop.permute.xlu0 %1346
          %1348 = vrot.lane.b32.xlu0 %v1275, 20
          %v1349 = vpop.permute.xlu0 %1348
          %1350 = vrot.lane.b32.xlu0 %v1276, 20
          %v1351 = vpop.permute.xlu0 %1350
          %1352 = vrot.lane.b32.xlu0 %v1277, 20
          %v1353 = vpop.permute.xlu0 %1352
          %1354 = vrot.lane.b32.xlu0 %v1278, 20
          %v1355 = vpop.permute.xlu0 %1354
          %1356 = vrot.lane.b32.xlu0 %v1279, 20
          %v1357 = vpop.permute.xlu0 %1356
          %1358 = vrot.lane.b32.xlu0 %v1280, 20
          %v1359 = vpop.permute.xlu0 %1358
          %1360 = vrot.lane.b32.xlu0 %v1281, 20
          %v1361 = vpop.permute.xlu0 %1360
          %1362 = vrot.lane.b32.xlu0 %v1282, 20
          %v1363 = vpop.permute.xlu0 %1362
          %1364 = vrot.lane.b32.xlu0 %v1283, 20
          %v1365 = vpop.permute.xlu0 %1364
          %1366 = vrot.lane.b32.xlu0 %v1284, 20
          %v1367 = vpop.permute.xlu0 %1366
          %1368 = vrot.lane.b32.xlu0 %v1285, 20
          %v1369 = vpop.permute.xlu0 %1368
          %1370 = vrot.lane.b32.xlu0 %v1286, 20
          %v1371 = vpop.permute.xlu0 %1370
          %1372 = vrot.lane.b32.xlu0 %v1287, 20
          %v1373 = vpop.permute.xlu0 %1372
          %1374 = vrot.lane.b32.xlu0 %v1288, 20
          %v1375 = vpop.permute.xlu0 %1374
          %1376 = vrot.lane.b32.xlu0 %v1289, 20
          %v1377 = vpop.permute.xlu0 %1376
          %1378 = vrot.lane.b32.xlu0 %v1290, 20
          %v1379 = vpop.permute.xlu0 %1378
          %1380 = vrot.lane.b32.xlu0 %v1291, 20
          %v1381 = vpop.permute.xlu0 %1380
          %1382 = vrot.lane.b32.xlu0 %v1292, 20
          %v1383 = vpop.permute.xlu0 %1382
          %1384 = vrot.lane.b32.xlu0 %v1293, 20
          %v1385 = vpop.permute.xlu0 %1384
          %1386 = vrot.lane.b32.xlu0 %v1294, 20
          %v1387 = vpop.permute.xlu0 %1386
          %1388 = vrot.lane.b32.xlu0 %v1295, 20
          %v1389 = vpop.permute.xlu0 %1388
          %1390 = vrot.lane.b32.xlu0 %v1296, 20
          %v1391 = vpop.permute.xlu0 %1390
          %1392 = vrot.lane.b32.xlu0 %v1297, 20
          %v1393 = vpop.permute.xlu0 %1392
          %vm1426 = vcmask 195744
          %1427 = vst.msk [vmem:[#allocation3] sm:$0xff] %vm1426, %v1331
          %1428 = vst.msk [vmem:[#allocation3 + $0x8] sm:$0xff] %vm1426, %v1333
          %1429 = vst.msk [vmem:[#allocation3 + $0x10] sm:$0xff] %vm1426, %v1335
          %1430 = vst.msk [vmem:[#allocation3 + $0x18] sm:$0xff] %vm1426, %v1337
          %1431 = vst.msk [vmem:[#allocation3 + $0x20] sm:$0xff] %vm1426, %v1339
          %1432 = vst.msk [vmem:[#allocation3 + $0x28] sm:$0xff] %vm1426, %v1341
          %1433 = vst.msk [vmem:[#allocation3 + $0x30] sm:$0xff] %vm1426, %v1343
          %1434 = vst.msk [vmem:[#allocation3 + $0x38] sm:$0xff] %vm1426, %v1345
          %1435 = vst.msk [vmem:[#allocation3 + $0x40] sm:$0xff] %vm1426, %v1347
          %1436 = vst.msk [vmem:[#allocation3 + $0x48] sm:$0xff] %vm1426, %v1349
          %1437 = vst.msk [vmem:[#allocation3 + $0x50] sm:$0xff] %vm1426, %v1351
          %1438 = vst.msk [vmem:[#allocation3 + $0x58] sm:$0xff] %vm1426, %v1353
          %1439 = vst.msk [vmem:[#allocation3 + $0x60] sm:$0xff] %vm1426, %v1355
          %1440 = vst.msk [vmem:[#allocation3 + $0x68] sm:$0xff] %vm1426, %v1357
          %1441 = vst.msk [vmem:[#allocation3 + $0x70] sm:$0xff] %vm1426, %v1359
          %1442 = vst.msk [vmem:[#allocation3 + $0x78] sm:$0xff] %vm1426, %v1361
          %1443 = vst.msk [vmem:[#allocation3 + $0x80] sm:$0xff] %vm1426, %v1363
          %1444 = vst.msk [vmem:[#allocation3 + $0x88] sm:$0xff] %vm1426, %v1365
          %1445 = vst.msk [vmem:[#allocation3 + $0x90] sm:$0xff] %vm1426, %v1367
          %1446 = vst.msk [vmem:[#allocation3 + $0x98] sm:$0xff] %vm1426, %v1369
          %1447 = vst.msk [vmem:[#allocation3 + $0xa0] sm:$0xff] %vm1426, %v1371
          %1448 = vst.msk [vmem:[#allocation3 + $0xa8] sm:$0xff] %vm1426, %v1373
          %1449 = vst.msk [vmem:[#allocation3 + $0xb0] sm:$0xff] %vm1426, %v1375
          %1450 = vst.msk [vmem:[#allocation3 + $0xb8] sm:$0xff] %vm1426, %v1377
          %1451 = vst.msk [vmem:[#allocation3 + $0xc0] sm:$0xff] %vm1426, %v1379
          %1452 = vst.msk [vmem:[#allocation3 + $0xc8] sm:$0xff] %vm1426, %v1381
          %1453 = vst.msk [vmem:[#allocation3 + $0xd0] sm:$0xff] %vm1426, %v1383
          %1454 = vst.msk [vmem:[#allocation3 + $0xd8] sm:$0xff] %vm1426, %v1385
          %1455 = vst.msk [vmem:[#allocation3 + $0xe0] sm:$0xff] %vm1426, %v1387
          %1456 = vst.msk [vmem:[#allocation3 + $0xe8] sm:$0xff] %vm1426, %v1389
          %1457 = vst.msk [vmem:[#allocation3 + $0xf0] sm:$0xff] %vm1426, %v1391
          %1458 = vst.msk [vmem:[#allocation3 + $0xf8] sm:$0xff] %vm1426, %v1393
          %s1459 = scalar_lea.vmem [#allocation2], 48
          %v1460 = vld [vmem:[%s1459] sm:$0xff]
          %v1461 = vld [vmem:[%s1459 + $0x8] sm:$0xff]
          %v1462 = vld [vmem:[%s1459 + $0x18] sm:$0xff]
          %v1463 = vld [vmem:[%s1459 + $0x20] sm:$0xff]
          %v1464 = vld [vmem:[%s1459 + $0x30] sm:$0xff]
          %v1465 = vld [vmem:[%s1459 + $0x38] sm:$0xff]
          %v1466 = vld [vmem:[%s1459 + $0x48] sm:$0xff]
          %v1467 = vld [vmem:[%s1459 + $0x50] sm:$0xff]
          %v1468 = vld [vmem:[%s1459 + $0x60] sm:$0xff]
          %v1469 = vld [vmem:[%s1459 + $0x68] sm:$0xff]
          %v1470 = vld [vmem:[%s1459 + $0x78] sm:$0xff]
          %v1471 = vld [vmem:[%s1459 + $0x80] sm:$0xff]
          %v1472 = vld [vmem:[%s1459 + $0x90] sm:$0xff]
          %v1473 = vld [vmem:[%s1459 + $0x98] sm:$0xff]
          %v1474 = vld [vmem:[%s1459 + $0xa8] sm:$0xff]
          %v1475 = vld [vmem:[%s1459 + $0xb0] sm:$0xff]
          %v1476 = vld [vmem:[%s1459 + $0xc0] sm:$0xff]
          %v1477 = vld [vmem:[%s1459 + $0xc8] sm:$0xff]
          %v1478 = vld [vmem:[%s1459 + $0xd8] sm:$0xff]
          %v1479 = vld [vmem:[%s1459 + $0xe0] sm:$0xff]
          %v1480 = vld [vmem:[%s1459 + $0xf0] sm:$0xff]
          %v1481 = vld [vmem:[%s1459 + $0xf8] sm:$0xff]
          %v1482 = vld [vmem:[%s1459 + $0x108] sm:$0xff]
          %v1483 = vld [vmem:[%s1459 + $0x110] sm:$0xff]
          %v1484 = vld [vmem:[%s1459 + $0x120] sm:$0xff]
          %v1485 = vld [vmem:[%s1459 + $0x128] sm:$0xff]
          %v1486 = vld [vmem:[%s1459 + $0x138] sm:$0xff]
          %v1487 = vld [vmem:[%s1459 + $0x140] sm:$0xff]
          %v1488 = vld [vmem:[%s1459 + $0x150] sm:$0xff]
          %v1489 = vld [vmem:[%s1459 + $0x158] sm:$0xff]
          %v1490 = vld [vmem:[%s1459 + $0x168] sm:$0xff]
          %v1491 = vld [vmem:[%s1459 + $0x170] sm:$0xff]
          %1524 = vrot.lane.b32.xlu0 %v1460, 24
          %v1525 = vpop.permute.xlu0 %1524
          %1526 = vrot.lane.b32.xlu0 %v1461, 24
          %v1527 = vpop.permute.xlu0 %1526
          %1528 = vrot.lane.b32.xlu0 %v1462, 24
          %v1529 = vpop.permute.xlu0 %1528
          %1530 = vrot.lane.b32.xlu0 %v1463, 24
          %v1531 = vpop.permute.xlu0 %1530
          %1532 = vrot.lane.b32.xlu0 %v1464, 24
          %v1533 = vpop.permute.xlu0 %1532
          %1534 = vrot.lane.b32.xlu0 %v1465, 24
          %v1535 = vpop.permute.xlu0 %1534
          %1536 = vrot.lane.b32.xlu0 %v1466, 24
          %v1537 = vpop.permute.xlu0 %1536
          %1538 = vrot.lane.b32.xlu0 %v1467, 24
          %v1539 = vpop.permute.xlu0 %1538
          %1540 = vrot.lane.b32.xlu0 %v1468, 24
          %v1541 = vpop.permute.xlu0 %1540
          %1542 = vrot.lane.b32.xlu0 %v1469, 24
          %v1543 = vpop.permute.xlu0 %1542
          %1544 = vrot.lane.b32.xlu0 %v1470, 24
          %v1545 = vpop.permute.xlu0 %1544
          %1546 = vrot.lane.b32.xlu0 %v1471, 24
          %v1547 = vpop.permute.xlu0 %1546
          %1548 = vrot.lane.b32.xlu0 %v1472, 24
          %v1549 = vpop.permute.xlu0 %1548
          %1550 = vrot.lane.b32.xlu0 %v1473, 24
          %v1551 = vpop.permute.xlu0 %1550
          %1552 = vrot.lane.b32.xlu0 %v1474, 24
          %v1553 = vpop.permute.xlu0 %1552
          %1554 = vrot.lane.b32.xlu0 %v1475, 24
          %v1555 = vpop.permute.xlu0 %1554
          %1556 = vrot.lane.b32.xlu0 %v1476, 24
          %v1557 = vpop.permute.xlu0 %1556
          %1558 = vrot.lane.b32.xlu0 %v1477, 24
          %v1559 = vpop.permute.xlu0 %1558
          %1560 = vrot.lane.b32.xlu0 %v1478, 24
          %v1561 = vpop.permute.xlu0 %1560
          %1562 = vrot.lane.b32.xlu0 %v1479, 24
          %v1563 = vpop.permute.xlu0 %1562
          %1564 = vrot.lane.b32.xlu0 %v1480, 24
          %v1565 = vpop.permute.xlu0 %1564
          %1566 = vrot.lane.b32.xlu0 %v1481, 24
          %v1567 = vpop.permute.xlu0 %1566
          %1568 = vrot.lane.b32.xlu0 %v1482, 24
          %v1569 = vpop.permute.xlu0 %1568
          %1570 = vrot.lane.b32.xlu0 %v1483, 24
          %v1571 = vpop.permute.xlu0 %1570
          %1572 = vrot.lane.b32.xlu0 %v1484, 24
          %v1573 = vpop.permute.xlu0 %1572
          %1574 = vrot.lane.b32.xlu0 %v1485, 24
          %v1575 = vpop.permute.xlu0 %1574
          %1576 = vrot.lane.b32.xlu0 %v1486, 24
          %v1577 = vpop.permute.xlu0 %1576
          %1578 = vrot.lane.b32.xlu0 %v1487, 24
          %v1579 = vpop.permute.xlu0 %1578
          %1580 = vrot.lane.b32.xlu0 %v1488, 24
          %v1581 = vpop.permute.xlu0 %1580
          %1582 = vrot.lane.b32.xlu0 %v1489, 24
          %v1583 = vpop.permute.xlu0 %1582
          %1584 = vrot.lane.b32.xlu0 %v1490, 24
          %v1585 = vpop.permute.xlu0 %1584
          %1586 = vrot.lane.b32.xlu0 %v1491, 24
          %v1587 = vpop.permute.xlu0 %1586
          %vm1620 = vcmask 228544
          %1621 = vst.msk [vmem:[#allocation3] sm:$0xff] %vm1620, %v1525
          %1622 = vst.msk [vmem:[#allocation3 + $0x8] sm:$0xff] %vm1620, %v1527
          %1623 = vst.msk [vmem:[#allocation3 + $0x10] sm:$0xff] %vm1620, %v1529
          %1624 = vst.msk [vmem:[#allocation3 + $0x18] sm:$0xff] %vm1620, %v1531
          %1625 = vst.msk [vmem:[#allocation3 + $0x20] sm:$0xff] %vm1620, %v1533
          %1626 = vst.msk [vmem:[#allocation3 + $0x28] sm:$0xff] %vm1620, %v1535
          %1627 = vst.msk [vmem:[#allocation3 + $0x30] sm:$0xff] %vm1620, %v1537
          %1628 = vst.msk [vmem:[#allocation3 + $0x38] sm:$0xff] %vm1620, %v1539
          %1629 = vst.msk [vmem:[#allocation3 + $0x40] sm:$0xff] %vm1620, %v1541
          %1630 = vst.msk [vmem:[#allocation3 + $0x48] sm:$0xff] %vm1620, %v1543
          %1631 = vst.msk [vmem:[#allocation3 + $0x50] sm:$0xff] %vm1620, %v1545
          %1632 = vst.msk [vmem:[#allocation3 + $0x58] sm:$0xff] %vm1620, %v1547
          %1633 = vst.msk [vmem:[#allocation3 + $0x60] sm:$0xff] %vm1620, %v1549
          %1634 = vst.msk [vmem:[#allocation3 + $0x68] sm:$0xff] %vm1620, %v1551
          %1635 = vst.msk [vmem:[#allocation3 + $0x70] sm:$0xff] %vm1620, %v1553
          %1636 = vst.msk [vmem:[#allocation3 + $0x78] sm:$0xff] %vm1620, %v1555
          %1637 = vst.msk [vmem:[#allocation3 + $0x80] sm:$0xff] %vm1620, %v1557
          %1638 = vst.msk [vmem:[#allocation3 + $0x88] sm:$0xff] %vm1620, %v1559
          %1639 = vst.msk [vmem:[#allocation3 + $0x90] sm:$0xff] %vm1620, %v1561
          %1640 = vst.msk [vmem:[#allocation3 + $0x98] sm:$0xff] %vm1620, %v1563
          %1641 = vst.msk [vmem:[#allocation3 + $0xa0] sm:$0xff] %vm1620, %v1565
          %1642 = vst.msk [vmem:[#allocation3 + $0xa8] sm:$0xff] %vm1620, %v1567
          %1643 = vst.msk [vmem:[#allocation3 + $0xb0] sm:$0xff] %vm1620, %v1569
          %1644 = vst.msk [vmem:[#allocation3 + $0xb8] sm:$0xff] %vm1620, %v1571
          %1645 = vst.msk [vmem:[#allocation3 + $0xc0] sm:$0xff] %vm1620, %v1573
          %1646 = vst.msk [vmem:[#allocation3 + $0xc8] sm:$0xff] %vm1620, %v1575
          %1647 = vst.msk [vmem:[#allocation3 + $0xd0] sm:$0xff] %vm1620, %v1577
          %1648 = vst.msk [vmem:[#allocation3 + $0xd8] sm:$0xff] %vm1620, %v1579
          %1649 = vst.msk [vmem:[#allocation3 + $0xe0] sm:$0xff] %vm1620, %v1581
          %1650 = vst.msk [vmem:[#allocation3 + $0xe8] sm:$0xff] %vm1620, %v1583
          %1651 = vst.msk [vmem:[#allocation3 + $0xf0] sm:$0xff] %vm1620, %v1585
          %1652 = vst.msk [vmem:[#allocation3 + $0xf8] sm:$0xff] %vm1620, %v1587
          %v1653 = vld [vmem:[%s1459 + $0x1] sm:$0xff]
          %v1654 = vld [vmem:[%s1459 + $0x9] sm:$0xff]
          %v1655 = vld [vmem:[%s1459 + $0x19] sm:$0xff]
          %v1656 = vld [vmem:[%s1459 + $0x21] sm:$0xff]
          %v1657 = vld [vmem:[%s1459 + $0x31] sm:$0xff]
          %v1658 = vld [vmem:[%s1459 + $0x39] sm:$0xff]
          %v1659 = vld [vmem:[%s1459 + $0x49] sm:$0xff]
          %v1660 = vld [vmem:[%s1459 + $0x51] sm:$0xff]
          %v1661 = vld [vmem:[%s1459 + $0x61] sm:$0xff]
          %v1662 = vld [vmem:[%s1459 + $0x69] sm:$0xff]
          %v1663 = vld [vmem:[%s1459 + $0x79] sm:$0xff]
          %v1664 = vld [vmem:[%s1459 + $0x81] sm:$0xff]
          %v1665 = vld [vmem:[%s1459 + $0x91] sm:$0xff]
          %v1666 = vld [vmem:[%s1459 + $0x99] sm:$0xff]
          %v1667 = vld [vmem:[%s1459 + $0xa9] sm:$0xff]
          %v1668 = vld [vmem:[%s1459 + $0xb1] sm:$0xff]
          %v1669 = vld [vmem:[%s1459 + $0xc1] sm:$0xff]
          %v1670 = vld [vmem:[%s1459 + $0xc9] sm:$0xff]
          %v1671 = vld [vmem:[%s1459 + $0xd9] sm:$0xff]
          %v1672 = vld [vmem:[%s1459 + $0xe1] sm:$0xff]
          %v1673 = vld [vmem:[%s1459 + $0xf1] sm:$0xff]
          %v1674 = vld [vmem:[%s1459 + $0xf9] sm:$0xff]
          %v1675 = vld [vmem:[%s1459 + $0x109] sm:$0xff]
          %v1676 = vld [vmem:[%s1459 + $0x111] sm:$0xff]
          %v1677 = vld [vmem:[%s1459 + $0x121] sm:$0xff]
          %v1678 = vld [vmem:[%s1459 + $0x129] sm:$0xff]
          %v1679 = vld [vmem:[%s1459 + $0x139] sm:$0xff]
          %v1680 = vld [vmem:[%s1459 + $0x141] sm:$0xff]
          %v1681 = vld [vmem:[%s1459 + $0x151] sm:$0xff]
          %v1682 = vld [vmem:[%s1459 + $0x159] sm:$0xff]
          %v1683 = vld [vmem:[%s1459 + $0x169] sm:$0xff]
          %v1684 = vld [vmem:[%s1459 + $0x171] sm:$0xff]
          %1717 = vrot.lane.b32.xlu0 %v1653, 28
          %v1718 = vpop.permute.xlu0 %1717
          %1719 = vrot.lane.b32.xlu0 %v1654, 28
          %v1720 = vpop.permute.xlu0 %1719
          %1721 = vrot.lane.b32.xlu0 %v1655, 28
          %v1722 = vpop.permute.xlu0 %1721
          %1723 = vrot.lane.b32.xlu0 %v1656, 28
          %v1724 = vpop.permute.xlu0 %1723
          %1725 = vrot.lane.b32.xlu0 %v1657, 28
          %v1726 = vpop.permute.xlu0 %1725
          %1727 = vrot.lane.b32.xlu0 %v1658, 28
          %v1728 = vpop.permute.xlu0 %1727
          %1729 = vrot.lane.b32.xlu0 %v1659, 28
          %v1730 = vpop.permute.xlu0 %1729
          %1731 = vrot.lane.b32.xlu0 %v1660, 28
          %v1732 = vpop.permute.xlu0 %1731
          %1733 = vrot.lane.b32.xlu0 %v1661, 28
          %v1734 = vpop.permute.xlu0 %1733
          %1735 = vrot.lane.b32.xlu0 %v1662, 28
          %v1736 = vpop.permute.xlu0 %1735
          %1737 = vrot.lane.b32.xlu0 %v1663, 28
          %v1738 = vpop.permute.xlu0 %1737
          %1739 = vrot.lane.b32.xlu0 %v1664, 28
          %v1740 = vpop.permute.xlu0 %1739
          %1741 = vrot.lane.b32.xlu0 %v1665, 28
          %v1742 = vpop.permute.xlu0 %1741
          %1743 = vrot.lane.b32.xlu0 %v1666, 28
          %v1744 = vpop.permute.xlu0 %1743
          %1745 = vrot.lane.b32.xlu0 %v1667, 28
          %v1746 = vpop.permute.xlu0 %1745
          %1747 = vrot.lane.b32.xlu0 %v1668, 28
          %v1748 = vpop.permute.xlu0 %1747
          %1749 = vrot.lane.b32.xlu0 %v1669, 28
          %v1750 = vpop.permute.xlu0 %1749
          %1751 = vrot.lane.b32.xlu0 %v1670, 28
          %v1752 = vpop.permute.xlu0 %1751
          %1753 = vrot.lane.b32.xlu0 %v1671, 28
          %v1754 = vpop.permute.xlu0 %1753
          %1755 = vrot.lane.b32.xlu0 %v1672, 28
          %v1756 = vpop.permute.xlu0 %1755
          %1757 = vrot.lane.b32.xlu0 %v1673, 28
          %v1758 = vpop.permute.xlu0 %1757
          %1759 = vrot.lane.b32.xlu0 %v1674, 28
          %v1760 = vpop.permute.xlu0 %1759
          %1761 = vrot.lane.b32.xlu0 %v1675, 28
          %v1762 = vpop.permute.xlu0 %1761
          %1763 = vrot.lane.b32.xlu0 %v1676, 28
          %v1764 = vpop.permute.xlu0 %1763
          %1765 = vrot.lane.b32.xlu0 %v1677, 28
          %v1766 = vpop.permute.xlu0 %1765
          %1767 = vrot.lane.b32.xlu0 %v1678, 28
          %v1768 = vpop.permute.xlu0 %1767
          %1769 = vrot.lane.b32.xlu0 %v1679, 28
          %v1770 = vpop.permute.xlu0 %1769
          %1771 = vrot.lane.b32.xlu0 %v1680, 28
          %v1772 = vpop.permute.xlu0 %1771
          %1773 = vrot.lane.b32.xlu0 %v1681, 28
          %v1774 = vpop.permute.xlu0 %1773
          %1775 = vrot.lane.b32.xlu0 %v1682, 28
          %v1776 = vpop.permute.xlu0 %1775
          %1777 = vrot.lane.b32.xlu0 %v1683, 28
          %v1778 = vpop.permute.xlu0 %1777
          %1779 = vrot.lane.b32.xlu0 %v1684, 28
          %v1780 = vpop.permute.xlu0 %1779
          %vm1813 = vcmask 261344
          %1814 = vst.msk [vmem:[#allocation3] sm:$0xff] %vm1813, %v1718
          %1815 = vst.msk [vmem:[#allocation3 + $0x8] sm:$0xff] %vm1813, %v1720
          %1816 = vst.msk [vmem:[#allocation3 + $0x10] sm:$0xff] %vm1813, %v1722
          %1817 = vst.msk [vmem:[#allocation3 + $0x18] sm:$0xff] %vm1813, %v1724
          %1818 = vst.msk [vmem:[#allocation3 + $0x20] sm:$0xff] %vm1813, %v1726
          %1819 = vst.msk [vmem:[#allocation3 + $0x28] sm:$0xff] %vm1813, %v1728
          %1820 = vst.msk [vmem:[#allocation3 + $0x30] sm:$0xff] %vm1813, %v1730
          %1821 = vst.msk [vmem:[#allocation3 + $0x38] sm:$0xff] %vm1813, %v1732
          %1822 = vst.msk [vmem:[#allocation3 + $0x40] sm:$0xff] %vm1813, %v1734
          %1823 = vst.msk [vmem:[#allocation3 + $0x48] sm:$0xff] %vm1813, %v1736
          %1824 = vst.msk [vmem:[#allocation3 + $0x50] sm:$0xff] %vm1813, %v1738
          %1825 = vst.msk [vmem:[#allocation3 + $0x58] sm:$0xff] %vm1813, %v1740
          %1826 = vst.msk [vmem:[#allocation3 + $0x60] sm:$0xff] %vm1813, %v1742
          %1827 = vst.msk [vmem:[#allocation3 + $0x68] sm:$0xff] %vm1813, %v1744
          %1828 = vst.msk [vmem:[#allocation3 + $0x70] sm:$0xff] %vm1813, %v1746
          %1829 = vst.msk [vmem:[#allocation3 + $0x78] sm:$0xff] %vm1813, %v1748
          %1830 = vst.msk [vmem:[#allocation3 + $0x80] sm:$0xff] %vm1813, %v1750
          %1831 = vst.msk [vmem:[#allocation3 + $0x88] sm:$0xff] %vm1813, %v1752
          %1832 = vst.msk [vmem:[#allocation3 + $0x90] sm:$0xff] %vm1813, %v1754
          %1833 = vst.msk [vmem:[#allocation3 + $0x98] sm:$0xff] %vm1813, %v1756
          %1834 = vst.msk [vmem:[#allocation3 + $0xa0] sm:$0xff] %vm1813, %v1758
          %1835 = vst.msk [vmem:[#allocation3 + $0xa8] sm:$0xff] %vm1813, %v1760
          %1836 = vst.msk [vmem:[#allocation3 + $0xb0] sm:$0xff] %vm1813, %v1762
          %1837 = vst.msk [vmem:[#allocation3 + $0xb8] sm:$0xff] %vm1813, %v1764
          %1838 = vst.msk [vmem:[#allocation3 + $0xc0] sm:$0xff] %vm1813, %v1766
          %1839 = vst.msk [vmem:[#allocation3 + $0xc8] sm:$0xff] %vm1813, %v1768
          %1840 = vst.msk [vmem:[#allocation3 + $0xd0] sm:$0xff] %vm1813, %v1770
          %1841 = vst.msk [vmem:[#allocation3 + $0xd8] sm:$0xff] %vm1813, %v1772
          %1842 = vst.msk [vmem:[#allocation3 + $0xe0] sm:$0xff] %vm1813, %v1774
          %1843 = vst.msk [vmem:[#allocation3 + $0xe8] sm:$0xff] %vm1813, %v1776
          %1844 = vst.msk [vmem:[#allocation3 + $0xf0] sm:$0xff] %vm1813, %v1778
          %1845 = vst.msk [vmem:[#allocation3 + $0xf8] sm:$0xff] %vm1813, %v1780
          %v1846 = vld [vmem:[%s1459 + $0x2] sm:$0xff]
          %v1847 = vld [vmem:[%s1459 + $0xa] sm:$0xff]
          %v1848 = vld [vmem:[%s1459 + $0x1a] sm:$0xff]
          %v1849 = vld [vmem:[%s1459 + $0x22] sm:$0xff]
          %v1850 = vld [vmem:[%s1459 + $0x32] sm:$0xff]
          %v1851 = vld [vmem:[%s1459 + $0x3a] sm:$0xff]
          %v1852 = vld [vmem:[%s1459 + $0x4a] sm:$0xff]
          %v1853 = vld [vmem:[%s1459 + $0x52] sm:$0xff]
          %v1854 = vld [vmem:[%s1459 + $0x62] sm:$0xff]
          %v1855 = vld [vmem:[%s1459 + $0x6a] sm:$0xff]
          %v1856 = vld [vmem:[%s1459 + $0x7a] sm:$0xff]
          %v1857 = vld [vmem:[%s1459 + $0x82] sm:$0xff]
          %v1858 = vld [vmem:[%s1459 + $0x92] sm:$0xff]
          %v1859 = vld [vmem:[%s1459 + $0x9a] sm:$0xff]
          %v1860 = vld [vmem:[%s1459 + $0xaa] sm:$0xff]
          %v1861 = vld [vmem:[%s1459 + $0xb2] sm:$0xff]
          %v1862 = vld [vmem:[%s1459 + $0xc2] sm:$0xff]
          %v1863 = vld [vmem:[%s1459 + $0xca] sm:$0xff]
          %v1864 = vld [vmem:[%s1459 + $0xda] sm:$0xff]
          %v1865 = vld [vmem:[%s1459 + $0xe2] sm:$0xff]
          %v1866 = vld [vmem:[%s1459 + $0xf2] sm:$0xff]
          %v1867 = vld [vmem:[%s1459 + $0xfa] sm:$0xff]
          %v1868 = vld [vmem:[%s1459 + $0x10a] sm:$0xff]
          %v1869 = vld [vmem:[%s1459 + $0x112] sm:$0xff]
          %v1870 = vld [vmem:[%s1459 + $0x122] sm:$0xff]
          %v1871 = vld [vmem:[%s1459 + $0x12a] sm:$0xff]
          %v1872 = vld [vmem:[%s1459 + $0x13a] sm:$0xff]
          %v1873 = vld [vmem:[%s1459 + $0x142] sm:$0xff]
          %v1874 = vld [vmem:[%s1459 + $0x152] sm:$0xff]
          %v1875 = vld [vmem:[%s1459 + $0x15a] sm:$0xff]
          %v1876 = vld [vmem:[%s1459 + $0x16a] sm:$0xff]
          %v1877 = vld [vmem:[%s1459 + $0x172] sm:$0xff]
          %1910 = vrot.lane.b32.xlu0 %v1846, 32
          %v1911 = vpop.permute.xlu0 %1910
          %1912 = vrot.lane.b32.xlu0 %v1847, 32
          %v1913 = vpop.permute.xlu0 %1912
          %1914 = vrot.lane.b32.xlu0 %v1848, 32
          %v1915 = vpop.permute.xlu0 %1914
          %1916 = vrot.lane.b32.xlu0 %v1849, 32
          %v1917 = vpop.permute.xlu0 %1916
          %1918 = vrot.lane.b32.xlu0 %v1850, 32
          %v1919 = vpop.permute.xlu0 %1918
          %1920 = vrot.lane.b32.xlu0 %v1851, 32
          %v1921 = vpop.permute.xlu0 %1920
          %1922 = vrot.lane.b32.xlu0 %v1852, 32
          %v1923 = vpop.permute.xlu0 %1922
          %1924 = vrot.lane.b32.xlu0 %v1853, 32
          %v1925 = vpop.permute.xlu0 %1924
          %1926 = vrot.lane.b32.xlu0 %v1854, 32
          %v1927 = vpop.permute.xlu0 %1926
          %1928 = vrot.lane.b32.xlu0 %v1855, 32
          %v1929 = vpop.permute.xlu0 %1928
          %1930 = vrot.lane.b32.xlu0 %v1856, 32
          %v1931 = vpop.permute.xlu0 %1930
          %1932 = vrot.lane.b32.xlu0 %v1857, 32
          %v1933 = vpop.permute.xlu0 %1932
          %1934 = vrot.lane.b32.xlu0 %v1858, 32
          %v1935 = vpop.permute.xlu0 %1934
          %1936 = vrot.lane.b32.xlu0 %v1859, 32
          %v1937 = vpop.permute.xlu0 %1936
          %1938 = vrot.lane.b32.xlu0 %v1860, 32
          %v1939 = vpop.permute.xlu0 %1938
          %1940 = vrot.lane.b32.xlu0 %v1861, 32
          %v1941 = vpop.permute.xlu0 %1940
          %1942 = vrot.lane.b32.xlu0 %v1862, 32
          %v1943 = vpop.permute.xlu0 %1942
          %1944 = vrot.lane.b32.xlu0 %v1863, 32
          %v1945 = vpop.permute.xlu0 %1944
          %1946 = vrot.lane.b32.xlu0 %v1864, 32
          %v1947 = vpop.permute.xlu0 %1946
          %1948 = vrot.lane.b32.xlu0 %v1865, 32
          %v1949 = vpop.permute.xlu0 %1948
          %1950 = vrot.lane.b32.xlu0 %v1866, 32
          %v1951 = vpop.permute.xlu0 %1950
          %1952 = vrot.lane.b32.xlu0 %v1867, 32
          %v1953 = vpop.permute.xlu0 %1952
          %1954 = vrot.lane.b32.xlu0 %v1868, 32
          %v1955 = vpop.permute.xlu0 %1954
          %1956 = vrot.lane.b32.xlu0 %v1869, 32
          %v1957 = vpop.permute.xlu0 %1956
          %1958 = vrot.lane.b32.xlu0 %v1870, 32
          %v1959 = vpop.permute.xlu0 %1958
          %1960 = vrot.lane.b32.xlu0 %v1871, 32
          %v1961 = vpop.permute.xlu0 %1960
          %1962 = vrot.lane.b32.xlu0 %v1872, 32
          %v1963 = vpop.permute.xlu0 %1962
          %1964 = vrot.lane.b32.xlu0 %v1873, 32
          %v1965 = vpop.permute.xlu0 %1964
          %1966 = vrot.lane.b32.xlu0 %v1874, 32
          %v1967 = vpop.permute.xlu0 %1966
          %1968 = vrot.lane.b32.xlu0 %v1875, 32
          %v1969 = vpop.permute.xlu0 %1968
          %1970 = vrot.lane.b32.xlu0 %v1876, 32
          %v1971 = vpop.permute.xlu0 %1970
          %1972 = vrot.lane.b32.xlu0 %v1877, 32
          %v1973 = vpop.permute.xlu0 %1972
          %vm2006 = vcmask 294144
          %2007 = vst.msk [vmem:[#allocation3] sm:$0xff] %vm2006, %v1911
          %2008 = vst.msk [vmem:[#allocation3 + $0x8] sm:$0xff] %vm2006, %v1913
          %2009 = vst.msk [vmem:[#allocation3 + $0x10] sm:$0xff] %vm2006, %v1915
          %2010 = vst.msk [vmem:[#allocation3 + $0x18] sm:$0xff] %vm2006, %v1917
          %2011 = vst.msk [vmem:[#allocation3 + $0x20] sm:$0xff] %vm2006, %v1919
          %2012 = vst.msk [vmem:[#allocation3 + $0x28] sm:$0xff] %vm2006, %v1921
          %2013 = vst.msk [vmem:[#allocation3 + $0x30] sm:$0xff] %vm2006, %v1923
          %2014 = vst.msk [vmem:[#allocation3 + $0x38] sm:$0xff] %vm2006, %v1925
          %2015 = vst.msk [vmem:[#allocation3 + $0x40] sm:$0xff] %vm2006, %v1927
          %2016 = vst.msk [vmem:[#allocation3 + $0x48] sm:$0xff] %vm2006, %v1929
          %2017 = vst.msk [vmem:[#allocation3 + $0x50] sm:$0xff] %vm2006, %v1931
          %2018 = vst.msk [vmem:[#allocation3 + $0x58] sm:$0xff] %vm2006, %v1933
          %2019 = vst.msk [vmem:[#allocation3 + $0x60] sm:$0xff] %vm2006, %v1935
          %2020 = vst.msk [vmem:[#allocation3 + $0x68] sm:$0xff] %vm2006, %v1937
          %2021 = vst.msk [vmem:[#allocation3 + $0x70] sm:$0xff] %vm2006, %v1939
          %2022 = vst.msk [vmem:[#allocation3 + $0x78] sm:$0xff] %vm2006, %v1941
          %2023 = vst.msk [vmem:[#allocation3 + $0x80] sm:$0xff] %vm2006, %v1943
          %2024 = vst.msk [vmem:[#allocation3 + $0x88] sm:$0xff] %vm2006, %v1945
          %2025 = vst.msk [vmem:[#allocation3 + $0x90] sm:$0xff] %vm2006, %v1947
          %2026 = vst.msk [vmem:[#allocation3 + $0x98] sm:$0xff] %vm2006, %v1949
          %2027 = vst.msk [vmem:[#allocation3 + $0xa0] sm:$0xff] %vm2006, %v1951
          %2028 = vst.msk [vmem:[#allocation3 + $0xa8] sm:$0xff] %vm2006, %v1953
          %2029 = vst.msk [vmem:[#allocation3 + $0xb0] sm:$0xff] %vm2006, %v1955
          %2030 = vst.msk [vmem:[#allocation3 + $0xb8] sm:$0xff] %vm2006, %v1957
          %2031 = vst.msk [vmem:[#allocation3 + $0xc0] sm:$0xff] %vm2006, %v1959
          %2032 = vst.msk [vmem:[#allocation3 + $0xc8] sm:$0xff] %vm2006, %v1961
          %2033 = vst.msk [vmem:[#allocation3 + $0xd0] sm:$0xff] %vm2006, %v1963
          %2034 = vst.msk [vmem:[#allocation3 + $0xd8] sm:$0xff] %vm2006, %v1965
          %2035 = vst.msk [vmem:[#allocation3 + $0xe0] sm:$0xff] %vm2006, %v1967
          %2036 = vst.msk [vmem:[#allocation3 + $0xe8] sm:$0xff] %vm2006, %v1969
          %2037 = vst.msk [vmem:[#allocation3 + $0xf0] sm:$0xff] %vm2006, %v1971
          %2038 = vst.msk [vmem:[#allocation3 + $0xf8] sm:$0xff] %vm2006, %v1973
        $region40: #{tpu_custom_call.1} parent=35 // pred_fallthru
          _
        %v2039 = vld [vmem:[#allocation3] sm:$0xff]
        %v2040 = vld [vmem:[#allocation3 + $0x8] sm:$0xff]
        %v2041 = vld [vmem:[#allocation3 + $0x10] sm:$0xff]
        %v2042 = vld [vmem:[#allocation3 + $0x18] sm:$0xff]
        %v2043 = vld [vmem:[#allocation3 + $0x20] sm:$0xff]
        %v2044 = vld [vmem:[#allocation3 + $0x28] sm:$0xff]
        %v2045 = vld [vmem:[#allocation3 + $0x30] sm:$0xff]
        %v2046 = vld [vmem:[#allocation3 + $0x38] sm:$0xff]
        %v2047 = vld [vmem:[#allocation3 + $0x40] sm:$0xff]
        %v2048 = vld [vmem:[#allocation3 + $0x48] sm:$0xff]
        %v2049 = vld [vmem:[#allocation3 + $0x50] sm:$0xff]
        %v2050 = vld [vmem:[#allocation3 + $0x58] sm:$0xff]
        %v2051 = vld [vmem:[#allocation3 + $0x60] sm:$0xff]
        %v2052 = vld [vmem:[#allocation3 + $0x68] sm:$0xff]
        %v2053 = vld [vmem:[#allocation3 + $0x70] sm:$0xff]
        %v2054 = vld [vmem:[#allocation3 + $0x78] sm:$0xff]
        %v2055 = vld [vmem:[#allocation3 + $0x80] sm:$0xff]
        %v2056 = vld [vmem:[#allocation3 + $0x88] sm:$0xff]
        %v2057 = vld [vmem:[#allocation3 + $0x90] sm:$0xff]
        %v2058 = vld [vmem:[#allocation3 + $0x98] sm:$0xff]
        %v2059 = vld [vmem:[#allocation3 + $0xa0] sm:$0xff]
        %v2060 = vld [vmem:[#allocation3 + $0xa8] sm:$0xff]
        %v2061 = vld [vmem:[#allocation3 + $0xb0] sm:$0xff]
        %v2062 = vld [vmem:[#allocation3 + $0xb8] sm:$0xff]
        %v2063 = vld [vmem:[#allocation3 + $0xc0] sm:$0xff]
        %v2064 = vld [vmem:[#allocation3 + $0xc8] sm:$0xff]
        %v2065 = vld [vmem:[#allocation3 + $0xd0] sm:$0xff]
        %v2066 = vld [vmem:[#allocation3 + $0xd8] sm:$0xff]
        %v2067 = vld [vmem:[#allocation3 + $0xe0] sm:$0xff]
        %v2068 = vld [vmem:[#allocation3 + $0xe8] sm:$0xff]
        %v2069 = vld [vmem:[#allocation3 + $0xf0] sm:$0xff]
        %v2070 = vld [vmem:[#allocation3 + $0xf8] sm:$0xff]
        %v2071 = vld [vmem:[%s259] sm:$0xff]
        %v2072 = vld [vmem:[%s259 + $0x8] sm:$0xff]
        %v2073 = vld [vmem:[%s259 + $0x10] sm:$0xff]
        %v2074 = vld [vmem:[%s259 + $0x18] sm:$0xff]
        %v2075 = vld [vmem:[%s259 + $0x20] sm:$0xf]
        %vm2076 = vcmask 293888
        %v2078 = vsel %vm2076, %v2039, 0
        %v2081 = vsel %vm2076, %v2040, 0
        %v2084 = vsel %vm2076, %v2041, 0
        %v2087 = vsel %vm2076, %v2042, 0
        %v2090 = vsel %vm2076, %v2043, 0
        %v2093 = vsel %vm2076, %v2044, 0
        %v2096 = vsel %vm2076, %v2045, 0
        %v2099 = vsel %vm2076, %v2046, 0
        %v2102 = vsel %vm2076, %v2047, 0
        %v2105 = vsel %vm2076, %v2048, 0
        %v2108 = vsel %vm2076, %v2049, 0
        %v2111 = vsel %vm2076, %v2050, 0
        %v2114 = vsel %vm2076, %v2051, 0
        %v2117 = vsel %vm2076, %v2052, 0
        %v2120 = vsel %vm2076, %v2053, 0
        %v2123 = vsel %vm2076, %v2054, 0
        %v2126 = vsel %vm2076, %v2055, 0
        %v2129 = vsel %vm2076, %v2056, 0
        %v2132 = vsel %vm2076, %v2057, 0
        %v2135 = vsel %vm2076, %v2058, 0
        %v2138 = vsel %vm2076, %v2059, 0
        %v2141 = vsel %vm2076, %v2060, 0
        %v2144 = vsel %vm2076, %v2061, 0
        %v2147 = vsel %vm2076, %v2062, 0
        %v2150 = vsel %vm2076, %v2063, 0
        %v2153 = vsel %vm2076, %v2064, 0
        %v2156 = vsel %vm2076, %v2065, 0
        %v2159 = vsel %vm2076, %v2066, 0
        %v2162 = vsel %vm2076, %v2067, 0
        %v2165 = vsel %vm2076, %v2068, 0
        %v2168 = vsel %vm2076, %v2069, 0
        %v2171 = vsel %vm2076, %v2070, 0
        %vm2173 = vcmask 1043456
        %v2175 = vsel %vm2173, %v2075, 0
        %2177 = vmatprep.subr.mxu0 0.0
        %2178 = vmatpush1.msra.mxu0 0.0
        %2179 = vmatprep.subr.mxu0 0.0
        %2180 = vmatpush1.msra.mxu0 0.0
        %2181 = vmatprep.subr.mxu0 0.0
        %2182 = vmatpush1.msra.mxu0 0.0
        %2183 = vmatprep.subr.mxu0 0.0
        %2184 = vmatpush1.msra.mxu0 0.0
        %2185 = vmatprep.subr.mxu0 0.0
        %2186 = vmatpush1.msra.mxu0 0.0
        %2187 = vmatprep.subr.mxu0 0.0
        %2188 = vmatpush1.msra.mxu0 0.0
        %2189 = vmatprep.subr.mxu0 0.0
        %2190 = vmatpush1.msra.mxu0 0.0
        %2191 = vmatprep.subr.mxu0 0.0
        %2192 = vmatpush1.msra.mxu0 0.0
        %2193 = vmatprep.subr.mxu0 0.0
        %2194 = vmatpush1.msra.mxu0 0.0
        %2195 = vmatprep.subr.mxu0 0.0
        %2196 = vmatpush1.msra.mxu0 0.0
        %2197 = vmatprep.subr.mxu0 0.0
        %2198 = vmatpush1.msra.mxu0 0.0
        %2199 = vmatprep.subr.mxu0 0.0
        %2200 = vmatpush1.msra.mxu0 %v2175
        %2201 = vmatprep.subr.mxu0 0.0
        %2202 = vmatpush1.msra.mxu0 %v2074
        %2203 = vmatprep.subr.mxu0 0.0
        %2204 = vmatpush1.msra.mxu0 %v2073
        %2205 = vmatprep.subr.mxu0 0.0
        %2206 = vmatpush1.msra.mxu0 %v2072
        %2207 = vmatprep.subr.mxu0 0.0
        %2208 = vmatpush1.msra.mxu0 %v2071
        %2209 = vmatprep.subr.mxu0 0.0
        %2210 = vmatpush2.msra.mxu0 0.0
        %2211 = vmatprep.subr.mxu0 0.0
        %2212 = vmatpush2.msra.mxu0 0.0
        %2213 = vmatprep.subr.mxu0 0.0
        %2214 = vmatpush2.msra.mxu0 0.0
        %2215 = vmatprep.subr.mxu0 0.0
        %2216 = vmatpush2.msra.mxu0 0.0
        %2217 = vmatprep.subr.mxu0 0.0
        %2218 = vmatpush2.msra.mxu0 0.0
        %2219 = vmatprep.subr.mxu0 0.0
        %2220 = vmatpush2.msra.mxu0 0.0
        %2221 = vmatprep.subr.mxu0 0.0
        %2222 = vmatpush2.msra.mxu0 0.0
        %2223 = vmatprep.subr.mxu0 0.0
        %2224 = vmatpush2.msra.mxu0 0.0
        %2225 = vmatprep.subr.mxu0 0.0
        %2226 = vmatpush2.msra.mxu0 0.0
        %2227 = vmatprep.subr.mxu0 0.0
        %2228 = vmatpush2.msra.mxu0 0.0
        %2229 = vmatprep.subr.mxu0 0.0
        %2230 = vmatpush2.msra.mxu0 0.0
        %2231 = vmatprep.subr.mxu0 0.0
        %2232 = vmatpush2.msra.mxu0 0.0
        %2233 = vmatprep.subr.mxu0 0.0
        %2234 = vmatpush2.msra.mxu0 0.0
        %2235 = vmatprep.subr.mxu0 0.0
        %2236 = vmatpush2.msra.mxu0 0.0
        %2237 = vmatprep.subr.mxu0 0.0
        %2238 = vmatpush2.msra.mxu0 0.0
        %2239 = vmatprep.subr.mxu0 0.0
        %2240 = vmatpush2.msra.mxu0 0.0
        %2241 = vmatprep.mubr.f32.mxu0 0.0
        %2242 = vmatmul.mubr.f32.gmra.mxu0 %v2078
        %v2243 = vpop.f32.mrf.mxu0
        %v2244 = vadd.f32 0.0, %v2243
        %v2245 = vpop.f32.mrf.mxu0
        %2246 = vmatprep.mubr.f32.mxu0 0.0
        %2247 = vmatmul.mubr.f32.gmra.mxu0 %v2081
        %v2248 = vpop.f32.mrf.mxu0
        %v2249 = vadd.f32 0.0, %v2248
        %v2250 = vpop.f32.mrf.mxu0
        %2251 = vmatprep.mubr.f32.mxu0 0.0
        %2252 = vmatmul.mubr.f32.gmra.mxu0 %v2084
        %v2253 = vpop.f32.mrf.mxu0
        %v2254 = vadd.f32 0.0, %v2253
        %v2255 = vpop.f32.mrf.mxu0
        %2256 = vmatprep.mubr.f32.mxu0 0.0
        %2257 = vmatmul.mubr.f32.gmra.mxu0 %v2087
        %v2258 = vpop.f32.mrf.mxu0
        %v2259 = vadd.f32 0.0, %v2258
        %v2260 = vpop.f32.mrf.mxu0
        %2261 = vmatprep.mubr.f32.mxu0 0.0
        %2262 = vmatmul.mubr.f32.gmra.mxu0 %v2090
        %v2263 = vpop.f32.mrf.mxu0
        %v2264 = vadd.f32 0.0, %v2263
        %v2265 = vpop.f32.mrf.mxu0
        %2266 = vmatprep.mubr.f32.mxu0 0.0
        %2267 = vmatmul.mubr.f32.gmra.mxu0 %v2093
        %v2268 = vpop.f32.mrf.mxu0
        %v2269 = vadd.f32 0.0, %v2268
        %v2270 = vpop.f32.mrf.mxu0
        %2271 = vmatprep.mubr.f32.mxu0 0.0
        %2272 = vmatmul.mubr.f32.gmra.mxu0 %v2096
        %v2273 = vpop.f32.mrf.mxu0
        %v2274 = vadd.f32 0.0, %v2273
        %v2275 = vpop.f32.mrf.mxu0
        %2276 = vmatprep.mubr.f32.mxu0 0.0
        %2277 = vmatmul.mubr.f32.gmra.mxu0 %v2099
        %v2278 = vpop.f32.mrf.mxu0
        %v2279 = vadd.f32 0.0, %v2278
        %v2280 = vpop.f32.mrf.mxu0
        %2281 = vmatprep.mubr.f32.mxu0 0.0
        %2282 = vmatmul.mubr.f32.gmra.mxu0 %v2102
        %v2283 = vpop.f32.mrf.mxu0
        %v2284 = vadd.f32 0.0, %v2283
        %v2285 = vpop.f32.mrf.mxu0
        %2286 = vmatprep.mubr.f32.mxu0 0.0
        %2287 = vmatmul.mubr.f32.gmra.mxu0 %v2105
        %v2288 = vpop.f32.mrf.mxu0
        %v2289 = vadd.f32 0.0, %v2288
        %v2290 = vpop.f32.mrf.mxu0
        %2291 = vmatprep.mubr.f32.mxu0 0.0
        %2292 = vmatmul.mubr.f32.gmra.mxu0 %v2108
        %v2293 = vpop.f32.mrf.mxu0
        %v2294 = vadd.f32 0.0, %v2293
        %v2295 = vpop.f32.mrf.mxu0
        %2296 = vmatprep.mubr.f32.mxu0 0.0
        %2297 = vmatmul.mubr.f32.gmra.mxu0 %v2111
        %v2298 = vpop.f32.mrf.mxu0
        %v2299 = vadd.f32 0.0, %v2298
        %v2300 = vpop.f32.mrf.mxu0
        %2301 = vmatprep.mubr.f32.mxu0 0.0
        %2302 = vmatmul.mubr.f32.gmra.mxu0 %v2114
        %v2303 = vpop.f32.mrf.mxu0
        %v2304 = vadd.f32 0.0, %v2303
        %v2305 = vpop.f32.mrf.mxu0
        %2306 = vmatprep.mubr.f32.mxu0 0.0
        %2307 = vmatmul.mubr.f32.gmra.mxu0 %v2117
        %v2308 = vpop.f32.mrf.mxu0
        %v2309 = vadd.f32 0.0, %v2308
        %v2310 = vpop.f32.mrf.mxu0
        %2311 = vmatprep.mubr.f32.mxu0 0.0
        %2312 = vmatmul.mubr.f32.gmra.mxu0 %v2120
        %v2313 = vpop.f32.mrf.mxu0
        %v2314 = vadd.f32 0.0, %v2313
        %v2315 = vpop.f32.mrf.mxu0
        %2316 = vmatprep.mubr.f32.mxu0 0.0
        %2317 = vmatmul.mubr.f32.gmra.mxu0 %v2123
        %v2318 = vpop.f32.mrf.mxu0
        %v2319 = vadd.f32 0.0, %v2318
        %v2320 = vpop.f32.mrf.mxu0
        %2321 = vmatprep.mubr.f32.mxu0 0.0
        %2322 = vmatmul.mubr.f32.gmra.mxu0 %v2126
        %v2323 = vpop.f32.mrf.mxu0
        %v2324 = vadd.f32 0.0, %v2323
        %v2325 = vpop.f32.mrf.mxu0
        %2326 = vmatprep.mubr.f32.mxu0 0.0
        %2327 = vmatmul.mubr.f32.gmra.mxu0 %v2129
        %v2328 = vpop.f32.mrf.mxu0
        %v2329 = vadd.f32 0.0, %v2328
        %v2330 = vpop.f32.mrf.mxu0
        %2331 = vmatprep.mubr.f32.mxu0 0.0
        %2332 = vmatmul.mubr.f32.gmra.mxu0 %v2132
        %v2333 = vpop.f32.mrf.mxu0
        %v2334 = vadd.f32 0.0, %v2333
        %v2335 = vpop.f32.mrf.mxu0
        %2336 = vmatprep.mubr.f32.mxu0 0.0
        %2337 = vmatmul.mubr.f32.gmra.mxu0 %v2135
        %v2338 = vpop.f32.mrf.mxu0
        %v2339 = vadd.f32 0.0, %v2338
        %v2340 = vpop.f32.mrf.mxu0
        %2341 = vmatprep.mubr.f32.mxu0 0.0
        %2342 = vmatmul.mubr.f32.gmra.mxu0 %v2138
        %v2343 = vpop.f32.mrf.mxu0
        %v2344 = vadd.f32 0.0, %v2343
        %v2345 = vpop.f32.mrf.mxu0
        %2346 = vmatprep.mubr.f32.mxu0 0.0
        %2347 = vmatmul.mubr.f32.gmra.mxu0 %v2141
        %v2348 = vpop.f32.mrf.mxu0
        %v2349 = vadd.f32 0.0, %v2348
        %v2350 = vpop.f32.mrf.mxu0
        %2351 = vmatprep.mubr.f32.mxu0 0.0
        %2352 = vmatmul.mubr.f32.gmra.mxu0 %v2144
        %v2353 = vpop.f32.mrf.mxu0
        %v2354 = vadd.f32 0.0, %v2353
        %v2355 = vpop.f32.mrf.mxu0
        %2356 = vmatprep.mubr.f32.mxu0 0.0
        %2357 = vmatmul.mubr.f32.gmra.mxu0 %v2147
        %v2358 = vpop.f32.mrf.mxu0
        %v2359 = vadd.f32 0.0, %v2358
        %v2360 = vpop.f32.mrf.mxu0
        %2361 = vmatprep.mubr.f32.mxu0 0.0
        %2362 = vmatmul.mubr.f32.gmra.mxu0 %v2150
        %v2363 = vpop.f32.mrf.mxu0
        %v2364 = vadd.f32 0.0, %v2363
        %v2365 = vpop.f32.mrf.mxu0
        %2366 = vmatprep.mubr.f32.mxu0 0.0
        %2367 = vmatmul.mubr.f32.gmra.mxu0 %v2153
        %v2368 = vpop.f32.mrf.mxu0
        %v2369 = vadd.f32 0.0, %v2368
        %v2370 = vpop.f32.mrf.mxu0
        %2371 = vmatprep.mubr.f32.mxu0 0.0
        %2372 = vmatmul.mubr.f32.gmra.mxu0 %v2156
        %v2373 = vpop.f32.mrf.mxu0
        %v2374 = vadd.f32 0.0, %v2373
        %v2375 = vpop.f32.mrf.mxu0
        %2376 = vmatprep.mubr.f32.mxu0 0.0
        %2377 = vmatmul.mubr.f32.gmra.mxu0 %v2159
        %v2378 = vpop.f32.mrf.mxu0
        %v2379 = vadd.f32 0.0, %v2378
        %v2380 = vpop.f32.mrf.mxu0
        %2381 = vmatprep.mubr.f32.mxu0 0.0
        %2382 = vmatmul.mubr.f32.gmra.mxu0 %v2162
        %v2383 = vpop.f32.mrf.mxu0
        %v2384 = vadd.f32 0.0, %v2383
        %v2385 = vpop.f32.mrf.mxu0
        %2386 = vmatprep.mubr.f32.mxu0 0.0
        %2387 = vmatmul.mubr.f32.gmra.mxu0 %v2165
        %v2388 = vpop.f32.mrf.mxu0
        %v2389 = vadd.f32 0.0, %v2388
        %v2390 = vpop.f32.mrf.mxu0
        %2391 = vmatprep.mubr.f32.mxu0 0.0
        %2392 = vmatmul.mubr.f32.gmra.mxu0 %v2168
        %v2393 = vpop.f32.mrf.mxu0
        %v2394 = vadd.f32 0.0, %v2393
        %v2395 = vpop.f32.mrf.mxu0
        %2396 = vmatprep.mubr.f32.mxu0 0.0
        %2397 = vmatmul.mubr.f32.gmra.mxu0 %v2171
        %v2398 = vpop.f32.mrf.mxu0
        %v2399 = vadd.f32 0.0, %v2398
        %v2400 = vpop.f32.mrf.mxu0
        %2401 = vdwg.mxu0
        %v2402 = vld [vmem:[%s265] sm:$0x1]
        %v2404 = vlaneseq
        %v2405 = vshrl.u32 %v2404, 7
        %v2406 = vsub.s32 0, %v2405
        %v2407 = vrot.slane %v2402, %v2406
        %v2409 = vmul.f32 %v2244, %v2407
        %v2410 = vmul.f32 %v2249, %v2407
        %v2411 = vmul.f32 %v2254, %v2407
        %v2412 = vmul.f32 %v2259, %v2407
        %v2413 = vmul.f32 %v2264, %v2407
        %v2414 = vmul.f32 %v2269, %v2407
        %v2415 = vmul.f32 %v2274, %v2407
        %v2416 = vmul.f32 %v2279, %v2407
        %v2417 = vmul.f32 %v2284, %v2407
        %v2418 = vmul.f32 %v2289, %v2407
        %v2419 = vmul.f32 %v2294, %v2407
        %v2420 = vmul.f32 %v2299, %v2407
        %v2421 = vmul.f32 %v2304, %v2407
        %v2422 = vmul.f32 %v2309, %v2407
        %v2423 = vmul.f32 %v2314, %v2407
        %v2424 = vmul.f32 %v2319, %v2407
        %v2425 = vmul.f32 %v2324, %v2407
        %v2426 = vmul.f32 %v2329, %v2407
        %v2427 = vmul.f32 %v2334, %v2407
        %v2428 = vmul.f32 %v2339, %v2407
        %v2429 = vmul.f32 %v2344, %v2407
        %v2430 = vmul.f32 %v2349, %v2407
        %v2431 = vmul.f32 %v2354, %v2407
        %v2432 = vmul.f32 %v2359, %v2407
        %v2433 = vmul.f32 %v2364, %v2407
        %v2434 = vmul.f32 %v2369, %v2407
        %v2435 = vmul.f32 %v2374, %v2407
        %v2436 = vmul.f32 %v2379, %v2407
        %v2437 = vmul.f32 %v2384, %v2407
        %v2438 = vmul.f32 %v2389, %v2407
        %v2439 = vmul.f32 %v2394, %v2407
        %v2440 = vmul.f32 %v2399, %v2407
        %2441 = vst [vmem:[%s247] sm:$0xff] %v2409
        %2442 = vst [vmem:[%s247 + $0x8] sm:$0xff] %v2410
        %2443 = vst [vmem:[%s247 + $0x10] sm:$0xff] %v2411
        %2444 = vst [vmem:[%s247 + $0x18] sm:$0xff] %v2412
        %2445 = vst [vmem:[%s247 + $0x20] sm:$0xff] %v2413
        %2446 = vst [vmem:[%s247 + $0x28] sm:$0xff] %v2414
        %2447 = vst [vmem:[%s247 + $0x30] sm:$0xff] %v2415
        %2448 = vst [vmem:[%s247 + $0x38] sm:$0xff] %v2416
        %2449 = vst [vmem:[%s247 + $0x40] sm:$0xff] %v2417
        %2450 = vst [vmem:[%s247 + $0x48] sm:$0xff] %v2418
        %2451 = vst [vmem:[%s247 + $0x50] sm:$0xff] %v2419
        %2452 = vst [vmem:[%s247 + $0x58] sm:$0xff] %v2420
        %2453 = vst [vmem:[%s247 + $0x60] sm:$0xff] %v2421
        %2454 = vst [vmem:[%s247 + $0x68] sm:$0xff] %v2422
        %2455 = vst [vmem:[%s247 + $0x70] sm:$0xff] %v2423
        %2456 = vst [vmem:[%s247 + $0x78] sm:$0xff] %v2424
        %2457 = vst [vmem:[%s247 + $0x80] sm:$0xff] %v2425
        %2458 = vst [vmem:[%s247 + $0x88] sm:$0xff] %v2426
        %2459 = vst [vmem:[%s247 + $0x90] sm:$0xff] %v2427
        %2460 = vst [vmem:[%s247 + $0x98] sm:$0xff] %v2428
        %2461 = vst [vmem:[%s247 + $0xa0] sm:$0xff] %v2429
        %2462 = vst [vmem:[%s247 + $0xa8] sm:$0xff] %v2430
        %2463 = vst [vmem:[%s247 + $0xb0] sm:$0xff] %v2431
        %2464 = vst [vmem:[%s247 + $0xb8] sm:$0xff] %v2432
        %2465 = vst [vmem:[%s247 + $0xc0] sm:$0xff] %v2433
        %2466 = vst [vmem:[%s247 + $0xc8] sm:$0xff] %v2434
        %2467 = vst [vmem:[%s247 + $0xd0] sm:$0xff] %v2435
        %2468 = vst [vmem:[%s247 + $0xd8] sm:$0xff] %v2436
        %2469 = vst [vmem:[%s247 + $0xe0] sm:$0xff] %v2437
        %2470 = vst [vmem:[%s247 + $0xe8] sm:$0xff] %v2438
        %2471 = vst [vmem:[%s247 + $0xf0] sm:$0xff] %v2439
        %2472 = vst [vmem:[%s247 + $0xf8] sm:$0xff] %v2440
        %s2473 = sand.u32 %s146, 1
        %s2474 = scalar_lea.sflag [#allocation5], %s2473
        %s2475 = sand.u32 %s146, 1
        %s2476 = smul.addr %s2475, 256
        %s2477 = scalar_lea.vmem [#allocation4], %s2476
        // Predicated region
        $region41: #{tpu_custom_call.1} parent=35 // pred_check
          %p2478 = pneg %p156
        $region42: #{tpu_custom_call.1} parent=35 // pred_check_branch
          %2480 = sbr.rel (%p2478) target = $region44
        $region43: #{tpu_custom_call.1} parent=35 // pred_region
          %s2482 = ssub.s32 4096, 4096
          %2483 = vsyncadd %s2474, %s2482
          %s2484 = smul.addr %s22, 32
          %s2485 = sadd.s32 %s23, %s2484
          %s2486 = smul.addr %s2485, 128
          %s2487 = scalar_lea.hbm %s4, %s2486
          %s2488 = sshll.u32 %s2477, 4
          %s2489 = int_to_ptr.vmem [resolvable:$true] %s2488
          %2494 = dma.vmem_to_hbm [thread:$0]  %s2489, 4096, %s2487, %s2474, 128, 128, 8
        $region44: #{tpu_custom_call.1} parent=35 // pred_fallthru
          _
      $region36: #{tpu_custom_call.1} parent=5 // pred_fallthru
        _
      %p2495 = scmp.le.s32.totalorder 2, %s13
      // Predicated region
      $region45: #{tpu_custom_call.1} parent=5 // pred_check
        %p2496 = pneg %p2495
      $region46: #{tpu_custom_call.1} parent=5 // pred_check_branch
        %2498 = sbr.rel (%p2496) target = $region48
      $region47: #{tpu_custom_call.1} parent=5 // pred_region
        %s2499 = ssub.s32 %s13, 2
        // Predicated region
        $region49: #{tpu_custom_call.1} parent=47 // pred_check
          %p2500 = pneg %p162
        $region50: #{tpu_custom_call.1} parent=47 // pred_check_branch
          %2502 = sbr.rel (%p2500) target = $region52
        $region51: #{tpu_custom_call.1} parent=47 // pred_region
          %s2503 = sand.u32 %s147, 1
          %s2504 = scalar_lea.sflag [#allocation5], %s2503
          %s2505 = sand.u32 %s147, 1
          %s2506 = smul.addr %s2505, 256
          %s2507 = scalar_lea.vmem [#allocation4], %s2506
          %2508 = dma.done %s2504, 4096
        $region52: #{tpu_custom_call.1} parent=47 // pred_fallthru
          _
      $region48: #{tpu_custom_call.1} parent=5 // pred_fallthru
        _
    $region6: #{tpu_custom_call.1} parent=1 // loop_footer
      %s17 = sadd.s32 1, %s13
    $region7: #{tpu_custom_call.1} parent=1 // loop_footer_branch
      %12 = sbr.rel target = $region3
    $region8: #{tpu_custom_call.1} parent=1 // loop_exit
      _
    %2509 = vsyncpa [#allocation5], 1
    %s2510 = scalar_lea.sflag [#allocation5], 1
    %2511 = vsyncpa %s2510, 1

</llo_original>
